<compile_context>
chip_gen: v6e
topology: v6e:2x2x1
jax: 0.10.0
libtpu: 0.0.40
codegen_flags: <defaults>
</compile_context>

<pallas_src>
import jax
import jax.numpy as jnp
from jax.experimental import pallas as pl
from jax.experimental.pallas import tpu as pltpu


# ---------------------------------------------------------------------------
# Pallas kernel: per-frequency complex matmul (VPU formulation, lane = freq).
#     z[b, o, f] = sum_i W[i, o, f] * x[b, i, f]      (complex)
# ---------------------------------------------------------------------------
def _freq_cmul_kernel(wr_ref, wi_ref, xr_ref, xi_ref, zr_ref, zi_ref):
    c_in = wr_ref.shape[0]
    bt, c_out, f_tile = zr_ref.shape
    # Largest strip (multiple of 128, dividing f_tile) whose zr+zi accumulators
    # stay within ~16 vregs -> no spill-induced VMEM round trips per Cin iter.
    sub = 128
    for cand in range(f_tile, 127, -128):
        if f_tile % cand == 0 and 2 * 4 * bt * c_out * cand <= 64 * 1024:
            sub = cand
            break
    for s in range(f_tile // sub):                     # static -> zero-cost views
        sl = slice(s * sub, (s + 1) * sub)
        zr = jnp.zeros((bt, c_out, sub), jnp.float32)
        zi = jnp.zeros((bt, c_out, sub), jnp.float32)
        for i in range(c_in):                          # static, unrolled (small width)
            xr_i = xr_ref[:, i:i + 1, sl]              # (bt, 1, sub)
            xi_i = xi_ref[:, i:i + 1, sl]
            wr_i = wr_ref[i:i + 1, :, sl]              # (1, c_out, sub)
            wi_i = wi_ref[i:i + 1, :, sl]
            ws_i = wr_i + wi_i                         # in-kernel Karatsuba weight sum
            xs_i = xr_i + xi_i
            xd_i = xi_i - xr_i
            k1 = xr_i * ws_i                           # 3 multiplies instead of 4
            zr = zr + (k1 - xs_i * wi_i)               # re = wr*xr - wi*xi
            zi = zi + (k1 + xd_i * wr_i)               # im = wr*xi + wi*xr
        zr_ref[:, :, sl] = zr
        zi_ref[:, :, sl] = zi


# ---------------------------------------------------------------------------
# Static tiling (Python ints, decided at trace time).
# ---------------------------------------------------------------------------
def _vmem_params():
    """Generation-aware VMEM limit and per-block tiling budget (bytes)."""
    cap = None
    try:
        cap = getattr(pltpu.get_tpu_info(), "vmem_capacity_bytes", None)
    except Exception:
        cap = None
    if not cap:
        cap = 64 * 1024 * 1024                    # conservative (v7x-safe) fallback
    vmem_limit = min(int(cap) * 3 // 4, 64 * 1024 * 1024)   # v7x ~48 MiB, v5e/v6e 64 MiB
    budget = max(vmem_limit - 16 * 1024 * 1024, 8 * 1024 * 1024)  # headroom for scratch
    return vmem_limit, budget


def _pick_tiles(c_in, c_out, batch, f):
    """f_tile divides f128; full batch per block by default (keeps W resident)."""
    vmem_limit, budget = _vmem_params()
    f128 = pl.cdiv(f, 128) * 128

    def per_lane_bytes(b_tile):  # double-buffered f32 over (wr, wi, xr, xi, zr, zi)
        return 2 * 4 * (2 * c_in * c_out + 2 * b_tile * c_in + 2 * b_tile * c_out)

    def best_f_tile(b_tile):
        cap_lanes = min(budget // per_lane_bytes(b_tile), 4096)
        best = 128
        for cand in range(128, f128 + 1, 128):
            if f128 % cand == 0 and cand <= cap_lanes:
                best = cand
        return best

    b_tile = batch
    f_tile = best_f_tile(b_tile)
    # Prefer shrinking the batch tile before letting f_tile drop below 512 lanes.
    while f_tile < min(512, f128) and b_tile > 1 and b_tile % 2 == 0:
        b_tile //= 2
        f_tile = best_f_tile(b_tile)
    return f_tile, b_tile, f128, vmem_limit


def freq_complex_matmul(wr, wi, xr, xi, *, f_tile, b_tile, vmem_limit):
    """wr/wi: (Cin, Cout, F_pad); xr/xi: (B, Cin, F_pad) -> zr/zi (B, Cout, F_pad)."""
    c_in, c_out, f_pad = wr.shape
    b = xr.shape[0]
    # Grid (fi outer, bi inner): W's block index depends only on fi, so the
    # pipeline skips the W re-DMA across the inner batch steps; the "parallel"
    # frequency axis gives v7x megacore disjoint W slabs (no batch split).
    grid = (f_pad // f_tile, b // b_tile)
    w_spec = pl.BlockSpec((c_in, c_out, f_tile), lambda fi, bi: (0, 0, fi))
    x_spec = pl.BlockSpec((b_tile, c_in, f_tile), lambda fi, bi: (bi, 0, fi))
    z_spec = pl.BlockSpec((b_tile, c_out, f_tile), lambda fi, bi: (bi, 0, fi))
    return pl.pallas_call(
        _freq_cmul_kernel,
        grid=grid,
        in_specs=[w_spec, w_spec, x_spec, x_spec],
        out_specs=(z_spec, z_spec),
        out_shape=(jax.ShapeDtypeStruct((b, c_out, f_pad), jnp.float32),
                   jax.ShapeDtypeStruct((b, c_out, f_pad), jnp.float32)),
        compiler_params=pltpu.CompilerParams(
            dimension_semantics=("parallel", "arbitrary"),
            vmem_limit_bytes=vmem_limit),
    )(wr, wi, xr, xi)


# ---------------------------------------------------------------------------
# Parameter setup (glue, plain JAX): Cayley orthogonalization of the
# frequency-domain weights.  The complex solve is rewritten as an equivalent
# real 2Cx2C block solve (no TPU complex linalg).
# ---------------------------------------------------------------------------
def cayley_ortho(w):
    """(I + A)^{-1} (I - A), A = W - W^H, for square complex W (== cayley_func)."""
    c = w.shape[-1]
    eye = jnp.eye(c, dtype=w.dtype)
    a = w - jnp.conj(jnp.swapaxes(w, -1, -2))
    m, rhs = eye + a, eye - a
    mr, mi = jnp.real(m), jnp.imag(m)
    br, bi = jnp.real(rhs), jnp.imag(rhs)
    m_blk = jnp.concatenate(
        [jnp.concatenate([mr, -mi], axis=-1),
         jnp.concatenate([mi, mr], axis=-1)], axis=-2)
    b_blk = jnp.concatenate([br, bi], axis=-2)
    z_blk = jnp.linalg.solve(m_blk, b_blk)
    return z_blk[..., :c, :] + 1j * z_blk[..., c:, :]


def get_wfft_ortho(weights, identity, gamma, depth, width, n, f_pad):
    """quasi_residual=True, mode='cayley'. Returns (wr, wi), each (D, Cin, Cout, F_pad)."""
    scale = depth ** (-0.5)
    v = identity[None] + weights * gamma * scale          # (D, Cout, Cin, 3, 3)
    vfft = jnp.fft.rfft2(v, s=(n, n), norm='ortho')       # (D, Cout, Cin, n, nh)
    vfft = jnp.transpose(vfft, (0, 3, 4, 1, 2))           # (D, n, nh, Cout, Cin)
    w_ortho = cayley_ortho(vfft)
    f = n * (n // 2 + 1)
    w_ortho = w_ortho.reshape(depth, f, width, width)     # (D, F, Cout, Cin)
    w_ortho = jnp.transpose(w_ortho, (0, 3, 2, 1))        # (D, Cin, Cout, F)
    pad = ((0, 0), (0, 0), (0, 0), (0, f_pad - f))
    return (jnp.pad(jnp.real(w_ortho), pad),
            jnp.pad(jnp.imag(w_ortho), pad))


# ---------------------------------------------------------------------------
# Forward pass (eval path of LiResConvOrtho.forward; zero_padding=True,
# centering uses the stored running_mean, activation = ReLU).
# ---------------------------------------------------------------------------
def layer_forward(x, wr, wi, bias_minus_mean, f_tile, b_tile, vmem_limit):
    b, c, h, w = x.shape
    pad = 3 // 2
    xp = jnp.pad(x, ((0, 0), (0, 0), (pad, pad), (pad, pad)))
    n = h + 2 * pad
    nh = n // 2 + 1
    f = n * nh
    f_pad = wr.shape[-1]
    xfft = jnp.fft.rfft2(xp, norm='ortho')                       # (B, C, n, nh)
    xf = xfft.reshape(b, c, f)                                   # free reshape
    fp = ((0, 0), (0, 0), (0, f_pad - f))
    xr = jnp.pad(jnp.real(xf), fp)                               # separate planes,
    xi = jnp.pad(jnp.imag(xf), fp)                               # no (2,...) stack copy
    zr, zi = freq_complex_matmul(wr, wi, xr, xi, f_tile=f_tile, b_tile=b_tile,
                                 vmem_limit=vmem_limit)
    c_out = zr.shape[1]
    zfft = (zr[:, :, :f] + 1j * zi[:, :, :f]).reshape(b, c_out, n, nh)
    z = jnp.fft.irfft2(zfft, norm='ortho')                       # (B, C, n, n)
    z = z[:, :, pad:n - pad, pad:n - pad]                        # (B, C, H, W)
    # bias add + ReLU: plain JAX so XLA fuses it into the irfft2 epilogue.
    return jnp.maximum(z + bias_minus_mean[None, :, None, None], 0.0)


@jax.jit
def li_res_conv_ortho_forward(x, weights, identity, gamma, bias, running_mean):
    depth, width = bias.shape
    b, c, h, w = x.shape
    n = h + 2 * (3 // 2)                                         # padding_input_size
    f = n * (n // 2 + 1)
    f_tile, b_tile, f_pad, vmem_limit = _pick_tiles(width, width, b, f)  # static ints
    wr_all, wi_all = get_wfft_ortho(weights, identity, gamma, depth, width, n, f_pad)
    biases = bias - running_mean
    for i in range(depth):
        x = layer_forward(x, wr_all[i], wi_all[i], biases[i],
                          f_tile, b_tile, vmem_limit)
    return x


# ---------------------------------------------------------------------------
# Pure-JAX reference (mirrors the PyTorch forward) for verification.
# ---------------------------------------------------------------------------
@jax.jit
def reference_forward(x, weights, identity, gamma, bias, running_mean):
    depth, width = bias.shape
    n = x.shape[-1] + 2
    nh = n // 2 + 1
    scale = depth ** (-0.5)
    v = identity[None] + weights * gamma * scale
    vfft = jnp.transpose(jnp.fft.rfft2(v, s=(n, n), norm='ortho'), (0, 3, 4, 1, 2))
    w_ortho = cayley_ortho(vfft).reshape(depth, n * nh, width, width)
    biases = bias - running_mean
    for i in range(depth):
        b = x.shape[0]
        xp = jnp.pad(x, ((0, 0), (0, 0), (1, 1), (1, 1)))
        xfft = jnp.fft.rfft2(xp, norm='ortho')
        xfft = jnp.transpose(xfft, (2, 3, 1, 0)).reshape(n * nh, width, b)
        zfft = jnp.einsum('fij,fjb->fib', w_ortho[i], xfft)
        zfft = jnp.transpose(zfft.reshape(n, nh, width, b), (3, 2, 0, 1))
        z = jnp.fft.irfft2(zfft, norm='ortho')[:, :, 1:-1, 1:-1]
        z = z + biases[i][None, :, None, None]
        x = jnp.maximum(z, 0.0)
    return x


if __name__ == "__main__":
    depth, width, input_size, batch, ks = 3, 8, 16, 2, 3

    key = jax.random.PRNGKey(0)
    k_w, k_x, k_b = jax.random.split(key, 3)

    # Deterministic parameter init following LiResConvOrtho.__init__
    # (mode='cayley' -> weight_rank == width; activation chosen as ReLU).
    weights = jax.random.normal(k_w, (depth, width, width, ks, ks),
                                jnp.float32) / (width * ks ** 2)
    identity = jnp.zeros((width, width, ks, ks), jnp.float32).at[
        jnp.arange(width), jnp.arange(width), 1, 1].set(1.0)
    gamma = jnp.ones((depth, width, 1, 1, 1), jnp.float32)
    bias = 0.05 * jax.random.normal(k_b, (depth, width), jnp.float32)
    running_mean = jnp.zeros((depth, width), jnp.float32)

    x = jax.random.normal(k_x, (batch, width, input_size, input_size), jnp.float32)

    out = li_res_conv_ortho_forward(x, weights, identity, gamma, bias, running_mean)
    out = jax.block_until_ready(out)

    ref = jax.block_until_ready(
        reference_forward(x, weights, identity, gamma, bias, running_mean))

    assert out.shape == (batch, width, input_size, input_size)
    assert jnp.allclose(out, ref, atol=2e-3, rtol=2e-3), \
        f"mismatch: max abs diff {jnp.max(jnp.abs(out - ref))}"

    print("KERNEL_OK")
</pallas_src>

<mosaic_0001>
module attributes {stable_mosaic.version = 11 : i64} {
  func.func @_freq_cmul_kernel(%arg0: i32, %arg1: i32, %arg2: memref<8x8x256xf32, #tpu.memory_space<vmem>>, %arg3: memref<8x8x256xf32, #tpu.memory_space<vmem>>, %arg4: memref<2x8x256xf32, #tpu.memory_space<vmem>>, %arg5: memref<2x8x256xf32, #tpu.memory_space<vmem>>, %arg6: memref<2x8x256xf32, #tpu.memory_space<vmem>>, %arg7: memref<2x8x256xf32, #tpu.memory_space<vmem>>) attributes {dimension_semantics = [#tpu.dimension_semantics<parallel>, #tpu.dimension_semantics<arbitrary>], iteration_bounds = array<i64: 1, 1>, scalar_prefetch = 0 : i64, scratch_operands = 0 : i64, tpu.core_type = #tpu.core_type<tc>, window_params = [{transform_indices = @transform_0, window_bounds = array<i64: 8, 8, 256>}, {transform_indices = @transform_1, window_bounds = array<i64: 8, 8, 256>}, {transform_indices = @transform_2, window_bounds = array<i64: 2, 8, 256>}, {transform_indices = @transform_3, window_bounds = array<i64: 2, 8, 256>}, {transform_indices = @transform_4, window_bounds = array<i64: 2, 8, 256>}, {transform_indices = @transform_5, window_bounds = array<i64: 2, 8, 256>}]} {
    %cst = arith.constant 0.000000e+00 : f32
    %0 = vector.broadcast %cst : f32 to vector<2x8x256xf32>
    %cst_0 = arith.constant 0.000000e+00 : f32
    %1 = vector.broadcast %cst_0 : f32 to vector<2x8x256xf32>
    %c0 = arith.constant 0 : index
    %c0_1 = arith.constant 0 : index
    %c0_2 = arith.constant 0 : index
    %2 = vector.load %arg4[%c0, %c0_1, %c0_2] : memref<2x8x256xf32, #tpu.memory_space<vmem>>, vector<2x1x256xf32>
    %c0_3 = arith.constant 0 : index
    %c0_4 = arith.constant 0 : index
    %c0_5 = arith.constant 0 : index
    %3 = vector.load %arg5[%c0_3, %c0_4, %c0_5] : memref<2x8x256xf32, #tpu.memory_space<vmem>>, vector<2x1x256xf32>
    %c0_6 = arith.constant 0 : index
    %c0_7 = arith.constant 0 : index
    %c0_8 = arith.constant 0 : index
    %4 = vector.load %arg2[%c0_6, %c0_7, %c0_8] : memref<8x8x256xf32, #tpu.memory_space<vmem>>, vector<1x8x256xf32>
    %c0_9 = arith.constant 0 : index
    %c0_10 = arith.constant 0 : index
    %c0_11 = arith.constant 0 : index
    %5 = vector.load %arg3[%c0_9, %c0_10, %c0_11] : memref<8x8x256xf32, #tpu.memory_space<vmem>>, vector<1x8x256xf32>
    %6 = arith.addf %4, %5 : vector<1x8x256xf32>
    %7 = arith.addf %2, %3 : vector<2x1x256xf32>
    %8 = arith.subf %3, %2 : vector<2x1x256xf32>
    %9 = vector.broadcast %2 : vector<2x1x256xf32> to vector<2x8x256xf32>
    %10 = vector.broadcast %6 : vector<1x8x256xf32> to vector<2x8x256xf32>
    %11 = arith.mulf %9, %10 : vector<2x8x256xf32>
    %12 = vector.broadcast %7 : vector<2x1x256xf32> to vector<2x8x256xf32>
    %13 = vector.broadcast %5 : vector<1x8x256xf32> to vector<2x8x256xf32>
    %14 = arith.mulf %12, %13 : vector<2x8x256xf32>
    %15 = arith.subf %11, %14 : vector<2x8x256xf32>
    %16 = arith.addf %0, %15 : vector<2x8x256xf32>
    %17 = vector.broadcast %8 : vector<2x1x256xf32> to vector<2x8x256xf32>
    %18 = vector.broadcast %4 : vector<1x8x256xf32> to vector<2x8x256xf32>
    %19 = arith.mulf %17, %18 : vector<2x8x256xf32>
    %20 = arith.addf %11, %19 : vector<2x8x256xf32>
    %21 = arith.addf %1, %20 : vector<2x8x256xf32>
    %c0_12 = arith.constant 0 : index
    %c1 = arith.constant 1 : index
    %c0_13 = arith.constant 0 : index
    %22 = vector.load %arg4[%c0_12, %c1, %c0_13] : memref<2x8x256xf32, #tpu.memory_space<vmem>>, vector<2x1x256xf32>
    %c0_14 = arith.constant 0 : index
    %c1_15 = arith.constant 1 : index
    %c0_16 = arith.constant 0 : index
    %23 = vector.load %arg5[%c0_14, %c1_15, %c0_16] : memref<2x8x256xf32, #tpu.memory_space<vmem>>, vector<2x1x256xf32>
    %c1_17 = arith.constant 1 : index
    %c0_18 = arith.constant 0 : index
    %c0_19 = arith.constant 0 : index
    %24 = vector.load %arg2[%c1_17, %c0_18, %c0_19] : memref<8x8x256xf32, #tpu.memory_space<vmem>>, vector<1x8x256xf32>
    %c1_20 = arith.constant 1 : index
    %c0_21 = arith.constant 0 : index
    %c0_22 = arith.constant 0 : index
    %25 = vector.load %arg3[%c1_20, %c0_21, %c0_22] : memref<8x8x256xf32, #tpu.memory_space<vmem>>, vector<1x8x256xf32>
    %26 = arith.addf %24, %25 : vector<1x8x256xf32>
    %27 = arith.addf %22, %23 : vector<2x1x256xf32>
    %28 = arith.subf %23, %22 : vector<2x1x256xf32>
    %29 = vector.broadcast %22 : vector<2x1x256xf32> to vector<2x8x256xf32>
    %30 = vector.broadcast %26 : vector<1x8x256xf32> to vector<2x8x256xf32>
    %31 = arith.mulf %29, %30 : vector<2x8x256xf32>
    %32 = vector.broadcast %27 : vector<2x1x256xf32> to vector<2x8x256xf32>
    %33 = vector.broadcast %25 : vector<1x8x256xf32> to vector<2x8x256xf32>
    %34 = arith.mulf %32, %33 : vector<2x8x256xf32>
    %35 = arith.subf %31, %34 : vector<2x8x256xf32>
    %36 = arith.addf %16, %35 : vector<2x8x256xf32>
    %37 = vector.broadcast %28 : vector<2x1x256xf32> to vector<2x8x256xf32>
    %38 = vector.broadcast %24 : vector<1x8x256xf32> to vector<2x8x256xf32>
    %39 = arith.mulf %37, %38 : vector<2x8x256xf32>
    %40 = arith.addf %31, %39 : vector<2x8x256xf32>
    %41 = arith.addf %21, %40 : vector<2x8x256xf32>
    %c0_23 = arith.constant 0 : index
    %c2 = arith.constant 2 : index
    %c0_24 = arith.constant 0 : index
    %42 = vector.load %arg4[%c0_23, %c2, %c0_24] : memref<2x8x256xf32, #tpu.memory_space<vmem>>, vector<2x1x256xf32>
    %c0_25 = arith.constant 0 : index
    %c2_26 = arith.constant 2 : index
    %c0_27 = arith.constant 0 : index
    %43 = vector.load %arg5[%c0_25, %c2_26, %c0_27] : memref<2x8x256xf32, #tpu.memory_space<vmem>>, vector<2x1x256xf32>
    %c2_28 = arith.constant 2 : index
    %c0_29 = arith.constant 0 : index
    %c0_30 = arith.constant 0 : index
    %44 = vector.load %arg2[%c2_28, %c0_29, %c0_30] : memref<8x8x256xf32, #tpu.memory_space<vmem>>, vector<1x8x256xf32>
    %c2_31 = arith.constant 2 : index
    %c0_32 = arith.constant 0 : index
    %c0_33 = arith.constant 0 : index
    %45 = vector.load %arg3[%c2_31, %c0_32, %c0_33] : memref<8x8x256xf32, #tpu.memory_space<vmem>>, vector<1x8x256xf32>
    %46 = arith.addf %44, %45 : vector<1x8x256xf32>
    %47 = arith.addf %42, %43 : vector<2x1x256xf32>
    %48 = arith.subf %43, %42 : vector<2x1x256xf32>
    %49 = vector.broadcast %42 : vector<2x1x256xf32> to vector<2x8x256xf32>
    %50 = vector.broadcast %46 : vector<1x8x256xf32> to vector<2x8x256xf32>
    %51 = arith.mulf %49, %50 : vector<2x8x256xf32>
    %52 = vector.broadcast %47 : vector<2x1x256xf32> to vector<2x8x256xf32>
    %53 = vector.broadcast %45 : vector<1x8x256xf32> to vector<2x8x256xf32>
    %54 = arith.mulf %52, %53 : vector<2x8x256xf32>
    %55 = arith.subf %51, %54 : vector<2x8x256xf32>
    %56 = arith.addf %36, %55 : vector<2x8x256xf32>
    %57 = vector.broadcast %48 : vector<2x1x256xf32> to vector<2x8x256xf32>
    %58 = vector.broadcast %44 : vector<1x8x256xf32> to vector<2x8x256xf32>
    %59 = arith.mulf %57, %58 : vector<2x8x256xf32>
    %60 = arith.addf %51, %59 : vector<2x8x256xf32>
    %61 = arith.addf %41, %60 : vector<2x8x256xf32>
    %c0_34 = arith.constant 0 : index
    %c3 = arith.constant 3 : index
    %c0_35 = arith.constant 0 : index
    %62 = vector.load %arg4[%c0_34, %c3, %c0_35] : memref<2x8x256xf32, #tpu.memory_space<vmem>>, vector<2x1x256xf32>
    %c0_36 = arith.constant 0 : index
    %c3_37 = arith.constant 3 : index
    %c0_38 = arith.constant 0 : index
    %63 = vector.load %arg5[%c0_36, %c3_37, %c0_38] : memref<2x8x256xf32, #tpu.memory_space<vmem>>, vector<2x1x256xf32>
    %c3_39 = arith.constant 3 : index
    %c0_40 = arith.constant 0 : index
    %c0_41 = arith.constant 0 : index
    %64 = vector.load %arg2[%c3_39, %c0_40, %c0_41] : memref<8x8x256xf32, #tpu.memory_space<vmem>>, vector<1x8x256xf32>
    %c3_42 = arith.constant 3 : index
    %c0_43 = arith.constant 0 : index
    %c0_44 = arith.constant 0 : index
    %65 = vector.load %arg3[%c3_42, %c0_43, %c0_44] : memref<8x8x256xf32, #tpu.memory_space<vmem>>, vector<1x8x256xf32>
    %66 = arith.addf %64, %65 : vector<1x8x256xf32>
    %67 = arith.addf %62, %63 : vector<2x1x256xf32>
    %68 = arith.subf %63, %62 : vector<2x1x256xf32>
    %69 = vector.broadcast %62 : vector<2x1x256xf32> to vector<2x8x256xf32>
    %70 = vector.broadcast %66 : vector<1x8x256xf32> to vector<2x8x256xf32>
    %71 = arith.mulf %69, %70 : vector<2x8x256xf32>
    %72 = vector.broadcast %67 : vector<2x1x256xf32> to vector<2x8x256xf32>
    %73 = vector.broadcast %65 : vector<1x8x256xf32> to vector<2x8x256xf32>
    %74 = arith.mulf %72, %73 : vector<2x8x256xf32>
    %75 = arith.subf %71, %74 : vector<2x8x256xf32>
    %76 = arith.addf %56, %75 : vector<2x8x256xf32>
    %77 = vector.broadcast %68 : vector<2x1x256xf32> to vector<2x8x256xf32>
    %78 = vector.broadcast %64 : vector<1x8x256xf32> to vector<2x8x256xf32>
    %79 = arith.mulf %77, %78 : vector<2x8x256xf32>
    %80 = arith.addf %71, %79 : vector<2x8x256xf32>
    %81 = arith.addf %61, %80 : vector<2x8x256xf32>
    %c0_45 = arith.constant 0 : index
    %c4 = arith.constant 4 : index
    %c0_46 = arith.constant 0 : index
    %82 = vector.load %arg4[%c0_45, %c4, %c0_46] : memref<2x8x256xf32, #tpu.memory_space<vmem>>, vector<2x1x256xf32>
    %c0_47 = arith.constant 0 : index
    %c4_48 = arith.constant 4 : index
    %c0_49 = arith.constant 0 : index
    %83 = vector.load %arg5[%c0_47, %c4_48, %c0_49] : memref<2x8x256xf32, #tpu.memory_space<vmem>>, vector<2x1x256xf32>
    %c4_50 = arith.constant 4 : index
    %c0_51 = arith.constant 0 : index
    %c0_52 = arith.constant 0 : index
    %84 = vector.load %arg2[%c4_50, %c0_51, %c0_52] : memref<8x8x256xf32, #tpu.memory_space<vmem>>, vector<1x8x256xf32>
    %c4_53 = arith.constant 4 : index
    %c0_54 = arith.constant 0 : index
    %c0_55 = arith.constant 0 : index
    %85 = vector.load %arg3[%c4_53, %c0_54, %c0_55] : memref<8x8x256xf32, #tpu.memory_space<vmem>>, vector<1x8x256xf32>
    %86 = arith.addf %84, %85 : vector<1x8x256xf32>
    %87 = arith.addf %82, %83 : vector<2x1x256xf32>
    %88 = arith.subf %83, %82 : vector<2x1x256xf32>
    %89 = vector.broadcast %82 : vector<2x1x256xf32> to vector<2x8x256xf32>
    %90 = vector.broadcast %86 : vector<1x8x256xf32> to vector<2x8x256xf32>
    %91 = arith.mulf %89, %90 : vector<2x8x256xf32>
    %92 = vector.broadcast %87 : vector<2x1x256xf32> to vector<2x8x256xf32>
    %93 = vector.broadcast %85 : vector<1x8x256xf32> to vector<2x8x256xf32>
    %94 = arith.mulf %92, %93 : vector<2x8x256xf32>
    %95 = arith.subf %91, %94 : vector<2x8x256xf32>
    %96 = arith.addf %76, %95 : vector<2x8x256xf32>
    %97 = vector.broadcast %88 : vector<2x1x256xf32> to vector<2x8x256xf32>
    %98 = vector.broadcast %84 : vector<1x8x256xf32> to vector<2x8x256xf32>
    %99 = arith.mulf %97, %98 : vector<2x8x256xf32>
    %100 = arith.addf %91, %99 : vector<2x8x256xf32>
    %101 = arith.addf %81, %100 : vector<2x8x256xf32>
    %c0_56 = arith.constant 0 : index
    %c5 = arith.constant 5 : index
    %c0_57 = arith.constant 0 : index
    %102 = vector.load %arg4[%c0_56, %c5, %c0_57] : memref<2x8x256xf32, #tpu.memory_space<vmem>>, vector<2x1x256xf32>
    %c0_58 = arith.constant 0 : index
    %c5_59 = arith.constant 5 : index
    %c0_60 = arith.constant 0 : index
    %103 = vector.load %arg5[%c0_58, %c5_59, %c0_60] : memref<2x8x256xf32, #tpu.memory_space<vmem>>, vector<2x1x256xf32>
    %c5_61 = arith.constant 5 : index
    %c0_62 = arith.constant 0 : index
    %c0_63 = arith.constant 0 : index
    %104 = vector.load %arg2[%c5_61, %c0_62, %c0_63] : memref<8x8x256xf32, #tpu.memory_space<vmem>>, vector<1x8x256xf32>
    %c5_64 = arith.constant 5 : index
    %c0_65 = arith.constant 0 : index
    %c0_66 = arith.constant 0 : index
    %105 = vector.load %arg3[%c5_64, %c0_65, %c0_66] : memref<8x8x256xf32, #tpu.memory_space<vmem>>, vector<1x8x256xf32>
    %106 = arith.addf %104, %105 : vector<1x8x256xf32>
    %107 = arith.addf %102, %103 : vector<2x1x256xf32>
    %108 = arith.subf %103, %102 : vector<2x1x256xf32>
    %109 = vector.broadcast %102 : vector<2x1x256xf32> to vector<2x8x256xf32>
    %110 = vector.broadcast %106 : vector<1x8x256xf32> to vector<2x8x256xf32>
    %111 = arith.mulf %109, %110 : vector<2x8x256xf32>
    %112 = vector.broadcast %107 : vector<2x1x256xf32> to vector<2x8x256xf32>
    %113 = vector.broadcast %105 : vector<1x8x256xf32> to vector<2x8x256xf32>
    %114 = arith.mulf %112, %113 : vector<2x8x256xf32>
    %115 = arith.subf %111, %114 : vector<2x8x256xf32>
    %116 = arith.addf %96, %115 : vector<2x8x256xf32>
    %117 = vector.broadcast %108 : vector<2x1x256xf32> to vector<2x8x256xf32>
    %118 = vector.broadcast %104 : vector<1x8x256xf32> to vector<2x8x256xf32>
    %119 = arith.mulf %117, %118 : vector<2x8x256xf32>
    %120 = arith.addf %111, %119 : vector<2x8x256xf32>
    %121 = arith.addf %101, %120 : vector<2x8x256xf32>
    %c0_67 = arith.constant 0 : index
    %c6 = arith.constant 6 : index
    %c0_68 = arith.constant 0 : index
    %122 = vector.load %arg4[%c0_67, %c6, %c0_68] : memref<2x8x256xf32, #tpu.memory_space<vmem>>, vector<2x1x256xf32>
    %c0_69 = arith.constant 0 : index
    %c6_70 = arith.constant 6 : index
    %c0_71 = arith.constant 0 : index
    %123 = vector.load %arg5[%c0_69, %c6_70, %c0_71] : memref<2x8x256xf32, #tpu.memory_space<vmem>>, vector<2x1x256xf32>
    %c6_72 = arith.constant 6 : index
    %c0_73 = arith.constant 0 : index
    %c0_74 = arith.constant 0 : index
    %124 = vector.load %arg2[%c6_72, %c0_73, %c0_74] : memref<8x8x256xf32, #tpu.memory_space<vmem>>, vector<1x8x256xf32>
    %c6_75 = arith.constant 6 : index
    %c0_76 = arith.constant 0 : index
    %c0_77 = arith.constant 0 : index
    %125 = vector.load %arg3[%c6_75, %c0_76, %c0_77] : memref<8x8x256xf32, #tpu.memory_space<vmem>>, vector<1x8x256xf32>
    %126 = arith.addf %124, %125 : vector<1x8x256xf32>
    %127 = arith.addf %122, %123 : vector<2x1x256xf32>
    %128 = arith.subf %123, %122 : vector<2x1x256xf32>
    %129 = vector.broadcast %122 : vector<2x1x256xf32> to vector<2x8x256xf32>
    %130 = vector.broadcast %126 : vector<1x8x256xf32> to vector<2x8x256xf32>
    %131 = arith.mulf %129, %130 : vector<2x8x256xf32>
    %132 = vector.broadcast %127 : vector<2x1x256xf32> to vector<2x8x256xf32>
    %133 = vector.broadcast %125 : vector<1x8x256xf32> to vector<2x8x256xf32>
    %134 = arith.mulf %132, %133 : vector<2x8x256xf32>
    %135 = arith.subf %131, %134 : vector<2x8x256xf32>
    %136 = arith.addf %116, %135 : vector<2x8x256xf32>
    %137 = vector.broadcast %128 : vector<2x1x256xf32> to vector<2x8x256xf32>
    %138 = vector.broadcast %124 : vector<1x8x256xf32> to vector<2x8x256xf32>
    %139 = arith.mulf %137, %138 : vector<2x8x256xf32>
    %140 = arith.addf %131, %139 : vector<2x8x256xf32>
    %141 = arith.addf %121, %140 : vector<2x8x256xf32>
    %c0_78 = arith.constant 0 : index
    %c7 = arith.constant 7 : index
    %c0_79 = arith.constant 0 : index
    %142 = vector.load %arg4[%c0_78, %c7, %c0_79] : memref<2x8x256xf32, #tpu.memory_space<vmem>>, vector<2x1x256xf32>
    %c0_80 = arith.constant 0 : index
    %c7_81 = arith.constant 7 : index
    %c0_82 = arith.constant 0 : index
    %143 = vector.load %arg5[%c0_80, %c7_81, %c0_82] : memref<2x8x256xf32, #tpu.memory_space<vmem>>, vector<2x1x256xf32>
    %c7_83 = arith.constant 7 : index
    %c0_84 = arith.constant 0 : index
    %c0_85 = arith.constant 0 : index
    %144 = vector.load %arg2[%c7_83, %c0_84, %c0_85] : memref<8x8x256xf32, #tpu.memory_space<vmem>>, vector<1x8x256xf32>
    %c7_86 = arith.constant 7 : index
    %c0_87 = arith.constant 0 : index
    %c0_88 = arith.constant 0 : index
    %145 = vector.load %arg3[%c7_86, %c0_87, %c0_88] : memref<8x8x256xf32, #tpu.memory_space<vmem>>, vector<1x8x256xf32>
    %146 = arith.addf %144, %145 : vector<1x8x256xf32>
    %147 = arith.addf %142, %143 : vector<2x1x256xf32>
    %148 = arith.subf %143, %142 : vector<2x1x256xf32>
    %149 = vector.broadcast %142 : vector<2x1x256xf32> to vector<2x8x256xf32>
    %150 = vector.broadcast %146 : vector<1x8x256xf32> to vector<2x8x256xf32>
    %151 = arith.mulf %149, %150 : vector<2x8x256xf32>
    %152 = vector.broadcast %147 : vector<2x1x256xf32> to vector<2x8x256xf32>
    %153 = vector.broadcast %145 : vector<1x8x256xf32> to vector<2x8x256xf32>
    %154 = arith.mulf %152, %153 : vector<2x8x256xf32>
    %155 = arith.subf %151, %154 : vector<2x8x256xf32>
    %156 = arith.addf %136, %155 : vector<2x8x256xf32>
    %157 = vector.broadcast %148 : vector<2x1x256xf32> to vector<2x8x256xf32>
    %158 = vector.broadcast %144 : vector<1x8x256xf32> to vector<2x8x256xf32>
    %159 = arith.mulf %157, %158 : vector<2x8x256xf32>
    %160 = arith.addf %151, %159 : vector<2x8x256xf32>
    %161 = arith.addf %141, %160 : vector<2x8x256xf32>
    %c0_89 = arith.constant 0 : index
    %c0_90 = arith.constant 0 : index
    %c0_91 = arith.constant 0 : index
    %162 = vector.load %arg6[%c0_89, %c0_90, %c0_91] : memref<2x8x256xf32, #tpu.memory_space<vmem>>, vector<2x8x256xf32>
    tpu.vector_store %arg6[%c0_89, %c0_90, %c0_91], %156 {strides = array<i32>} : memref<2x8x256xf32, #tpu.memory_space<vmem>>, vector<2x8x256xf32>,
    %c0_92 = arith.constant 0 : index
    %c0_93 = arith.constant 0 : index
    %c0_94 = arith.constant 0 : index
    %163 = vector.load %arg7[%c0_92, %c0_93, %c0_94] : memref<2x8x256xf32, #tpu.memory_space<vmem>>, vector<2x8x256xf32>
    tpu.vector_store %arg7[%c0_92, %c0_93, %c0_94], %161 {strides = array<i32>} : memref<2x8x256xf32, #tpu.memory_space<vmem>>, vector<2x8x256xf32>,
    return
  }
  func.func @transform_0(%arg0: i32, %arg1: i32) -> (i32, i32, i32) {
    %c0_i32 = arith.constant 0 : i32
    %c0_i32_0 = arith.constant 0 : i32
    %c0_i32_1 = arith.constant 0 : i32
    return %c0_i32, %c0_i32_0, %arg0 : i32, i32, i32
  }
  func.func @transform_1(%arg0: i32, %arg1: i32) -> (i32, i32, i32) {
    %c0_i32 = arith.constant 0 : i32
    %c0_i32_0 = arith.constant 0 : i32
    %c0_i32_1 = arith.constant 0 : i32
    return %c0_i32, %c0_i32_0, %arg0 : i32, i32, i32
  }
  func.func @transform_2(%arg0: i32, %arg1: i32) -> (i32, i32, i32) {
    %c0_i32 = arith.constant 0 : i32
    %c0_i32_0 = arith.constant 0 : i32
    return %arg1, %c0_i32, %arg0 : i32, i32, i32
  }
  func.func @transform_3(%arg0: i32, %arg1: i32) -> (i32, i32, i32) {
    %c0_i32 = arith.constant 0 : i32
    %c0_i32_0 = arith.constant 0 : i32
    return %arg1, %c0_i32, %arg0 : i32, i32, i32
  }
  func.func @transform_4(%arg0: i32, %arg1: i32) -> (i32, i32, i32) {
    %c0_i32 = arith.constant 0 : i32
    %c0_i32_0 = arith.constant 0 : i32
    return %arg1, %c0_i32, %arg0 : i32, i32, i32
  }
  func.func @transform_5(%arg0: i32, %arg1: i32) -> (i32, i32, i32) {
    %c0_i32 = arith.constant 0 : i32
    %c0_i32_0 = arith.constant 0 : i32
    return %arg1, %c0_i32, %arg0 : i32, i32, i32
  }
}

</mosaic_0001>

<llo_original>
// kernel: custom-call.8
$region0: #{custom-call.8}
  %s0 = inlined_call_operand.vmem [shape: f32[3,18,10,16,16], index: 0, kind: input, shape index: {}]
  %s1 = inlined_call_operand.vmem [shape: f32[3,18,10,16,16], index: 1, kind: output, shape index: {0}]
  %s2 = inlined_call_operand.hbm [shape: s32[3,18,10,16], index: 2, kind: output, shape index: {1}]
  %s3 = inlined_call_operand.vmem [shape: s32[3,18,10,16], index: 3, kind: output, shape index: {2}]
  %4 = xla_tuple %s1, %s2, %s3
  $region1: #{custom-call.8} parent=0
    #allocation0 [shape = 'u8[16384]{0}', space=vmem, size = 0x4000, scoped, tag = 'operand span for operand 0']
    #allocation1 [shape = 'u8[16384]{0}', space=vmem, size = 0x4000, scoped, tag = 'operand span for operand 1']
    #allocation2 [shape = 'u8[8192]{0}', space=vmem, size = 0x2000, scoped, tag = 'operand span for operand 2']
    #allocation3 [shape = 's32[2]{0}', space=sflag, size = 0x8, scoped, tag = 'scoped memory for custom-call.8']
    #allocation4 [shape = 'u8[8192]{0}', space=vmem, size = 0x2000, scoped, tag = 'operand span for operand 3']
    %5 = vsyncpa [#allocation3], 0
    %s6 = scalar_lea.sflag [#allocation3], 1
    %7 = vsyncpa %s6, 0
    loop: start=0, step=1, limit=542
    $region2: #{custom-call.8} parent=1 // loop_pre_header
      _
    $region3: #{custom-call.8} parent=1 // loop_header
      %s9 = sphi 0, %s13
      %p10 = scmp.ge.s32.totalorder %s9, 542
      %s16 = sphi 0, %s35
      %s17 = sphi 0, %s31
      %s18 = sphi 0, %s27
      %s19 = sphi 0, %s16
      %s20 = sphi 0, %s17
      %s21 = sphi 0, %s18
      %s22 = sphi 0, %s19
      %s23 = sphi 0, %s20
      %s24 = sphi 0, %s21
      %s44 = sphi 0, %s46
      %s47 = sphi 0, %s44
      %s48 = sphi 0, %s47
      %s64 = sphi 0, %s48
      %s76 = sphi 0, %s78
      %s79 = sphi 0, %s76
      %s80 = sphi 0, %s79
      %s96 = sphi 0, %s80
    $region4: #{custom-call.8} parent=1 // loop_header_branch
      %12 = sbr.rel (%p10) target = $region8
    $region5: #{custom-call.8} parent=1 // loop_body
      %s14 = ssub.s32 %s9, 1
      %s15 = ssub.s32 %s9, 2
      %s25 = sadd.s32 1, %s18
      %p26 = scmp.ge.s32.totalorder %s25, 10
      %s27 = scalar_select %p26, 0, %s25
      %s28 = sadd.s32 1, %s17
      %s29 = scalar_select %p26, %s28, %s17
      %p30 = scmp.ge.s32.totalorder %s29, 18
      %s31 = scalar_select %p30, 0, %s29
      %s32 = sadd.s32 1, %s16
      %s33 = scalar_select %p30, %s32, %s16
      %p34 = scmp.ge.s32.totalorder %s33, 3
      %s35 = scalar_select %p34, 0, %s33
      %s36 = sshrl.u32 %s18, 3
      %s37 = sshrl.u32 %s27, 3
      %s38 = ssub.s32 %s16, %s35
      %s39 = ssub.s32 %s17, %s31
      %s40 = sor.u32 %s38, %s39
      %s41 = ssub.s32 %s36, %s37
      %s42 = sor.u32 %s40, %s41
      %p43 = scmp.eq.s32.totalorder %s42, 0
      %s45 = sadd.s32 %s44, 1
      %s46 = scalar_select %p43, %s44, %s45
      %p49 = pneg %p43
      %p50 = scmp.eq.s32.totalorder %s9, 539
      %p51 = por %p49, %p50
      %p52 = scmp.ne.s32.totalorder %s44, %s47
      %p53 = scmp.eq.s32.totalorder %s9, 0
      %p54 = por %p52, %p53
      %p55 = scmp.ne.s32.totalorder %s44, %s47
      %p56 = scmp.eq.s32.totalorder %s14, 539
      %p57 = por %p55, %p56
      %p58 = scmp.ne.s32.totalorder %s47, %s48
      %p59 = scmp.eq.s32.totalorder %s14, 0
      %p60 = por %p58, %p59
      %p61 = scmp.ne.s32.totalorder %s47, %s48
      %p62 = scmp.eq.s32.totalorder %s15, 539
      %p63 = por %p61, %p62
      %p65 = scmp.ne.s32.totalorder %s48, %s64
      %p66 = scmp.eq.s32.totalorder %s15, 0
      %p67 = por %p65, %p66
      %s68 = sshrl.u32 %s18, 3
      %s69 = sshrl.u32 %s27, 3
      %s70 = ssub.s32 %s16, %s35
      %s71 = ssub.s32 %s17, %s31
      %s72 = sor.u32 %s70, %s71
      %s73 = ssub.s32 %s68, %s69
      %s74 = sor.u32 %s72, %s73
      %p75 = scmp.eq.s32.totalorder %s74, 0
      %s77 = sadd.s32 %s76, 1
      %s78 = scalar_select %p75, %s76, %s77
      %p81 = pneg %p75
      %p82 = scmp.eq.s32.totalorder %s9, 539
      %p83 = por %p81, %p82
      %p84 = scmp.ne.s32.totalorder %s76, %s79
      %p85 = scmp.eq.s32.totalorder %s9, 0
      %p86 = por %p84, %p85
      %p87 = scmp.ne.s32.totalorder %s76, %s79
      %p88 = scmp.eq.s32.totalorder %s14, 539
      %p89 = por %p87, %p88
      %p90 = scmp.ne.s32.totalorder %s79, %s80
      %p91 = scmp.eq.s32.totalorder %s14, 0
      %p92 = por %p90, %p91
      %p93 = scmp.ne.s32.totalorder %s79, %s80
      %p94 = scmp.eq.s32.totalorder %s15, 539
      %p95 = por %p93, %p94
      %p97 = scmp.ne.s32.totalorder %s80, %s96
      %p98 = scmp.eq.s32.totalorder %s15, 0
      %p99 = por %p97, %p98
      %p100 = scmp.le.s32.totalorder 1, %s9
      %p101 = scmp.lt.s32.totalorder %s9, 541
      %p102 = pnand %p100, %p101
      %p103 = pneg %p102
      // Predicated region
      $region9: #{custom-call.8} parent=5 // pred_check
        _
      $region10: #{custom-call.8} parent=5 // pred_check_branch
        %105 = sbr.rel (%p102) target = $region12
      $region11: #{custom-call.8} parent=5 // pred_region
        %s106 = ssub.s32 %s9, 1
      $region12: #{custom-call.8} parent=5 // pred_fallthru
        _
      %p107 = scmp.lt.s32.totalorder %s9, 540
      // Predicated region
      $region13: #{custom-call.8} parent=5 // pred_check
        %p108 = pneg %p107
      $region14: #{custom-call.8} parent=5 // pred_check_branch
        %110 = sbr.rel (%p108) target = $region16
      $region15: #{custom-call.8} parent=5 // pred_region
        %s111 = sand.u32 %s9, 1
        %s112 = sand.u32 %s9, 1
        %s113 = smul.addr %s112, 16
        %s114 = scalar_lea.vmem [#allocation0], %s113
        %s115 = smul.addr %s17, 10
        %s116 = sadd.s32 %s18, %s115
        %s117 = smul.addr %s16, 180
        %s118 = sadd.s32 %s116, %s117
        %s119 = smul.addr %s118, 16
        %s120 = scalar_lea.vmem %s0, %s119
        // Predicated region
        $region17: #{custom-call.8} parent=15 // pred_check
          _
        $region18: #{custom-call.8} parent=15 // pred_check_branch
          %122 = sbr.rel (0) target = $region20
        $region19: #{custom-call.8} parent=15 // pred_region
          // Predicated region
          $region21: #{custom-call.8} parent=19 // pred_check
            _
          $region22: #{custom-call.8} parent=19 // pred_check_branch
            %124 = sbr.rel (0) target = $region24
          $region23: #{custom-call.8} parent=19 // pred_region
            loop: start=0, step=1, limit=1
            $region25: #{custom-call.8} parent=23 // loop_pre_header
              _
            $region26: #{custom-call.8} parent=23 // loop_header
              %s126 = sphi 0, %s130
              %p127 = scmp.ge.s32.totalorder %s126, 1
              %s131 = sphi %s120, %s120
              %s132 = sphi %s114, %s114
            $region27: #{custom-call.8} parent=23 // loop_header_branch
              %129 = sbr.rel (%p127) target = $region31
            $region28: #{custom-call.8} parent=23 // loop_body
              %v133 = vld [vmem:[%s131] sm:$0xff]
              %134 = vst [vmem:[%s132] sm:$0xff] %v133
              %v135 = vld [vmem:[%s131 + $0x8] sm:$0xff]
              %136 = vst [vmem:[%s132 + $0x8] sm:$0xff] %v135
            $region29: #{custom-call.8} parent=23 // loop_footer
              %s130 = sadd.s32 1, %s126
            $region30: #{custom-call.8} parent=23 // loop_footer_branch
              %125 = sbr.rel target = $region26
            $region31: #{custom-call.8} parent=23 // loop_exit
              _
          $region24: #{custom-call.8} parent=19 // pred_fallthru
            _
          // Predicated region
          $region32: #{custom-call.8} parent=19 // pred_check
            _
          $region33: #{custom-call.8} parent=19 // pred_check_branch
            %138 = sbr.rel target = $region35
          $region34: #{custom-call.8} parent=19 // pred_region
            _
          $region35: #{custom-call.8} parent=19 // pred_fallthru
            _
        $region20: #{custom-call.8} parent=15 // pred_fallthru
          _
        %139 = vnop
      $region16: #{custom-call.8} parent=5 // pred_fallthru
        _
      %p140 = scmp.le.s32.totalorder 1, %s9
      %p141 = scmp.lt.s32.totalorder %s9, 541
      %p142 = pnand %p140, %p141
      %p143 = pneg %p142
      // Predicated region
      $region36: #{custom-call.8} parent=5 // pred_check
        _
      $region37: #{custom-call.8} parent=5 // pred_check_branch
        %145 = sbr.rel (%p142) target = $region39
      $region38: #{custom-call.8} parent=5 // pred_region
        #allocation5 [shape = 's32[16,128]{1,0}', space=vmem, size = 0x2000, scoped, tag = 'scratch for permutations']
        %s146 = ssub.s32 %s9, 1
        %s147 = sand.u32 %s14, 1
        %s148 = sand.u32 %s14, 1
        %s149 = smul.addr %s148, 16
        %s150 = scalar_lea.vmem [#allocation0], %s149
        %s151 = sand.u32 %s14, 1
        %s152 = sand.u32 %s14, 1
        %s153 = smul.addr %s152, 16
        %s154 = scalar_lea.vmem [#allocation0], %s153
        %s155 = sand.u32 %s14, 1
        %s156 = sand.u32 %s14, 1
        %s157 = smul.addr %s156, 16
        %s158 = scalar_lea.vmem [#allocation1], %s157
        %p159 = pneg %p60
        %p160 = pneg %p57
        %s161 = sand.u32 %s47, 1
        %s162 = scalar_lea.sflag [#allocation3], %s161
        %s163 = sand.u32 %s47, 1
        %s164 = smul.addr %s163, 8
        %s165 = scalar_lea.vmem [#allocation2], %s164
        %p166 = pneg %p92
        %p167 = pneg %p89
        %s168 = sand.u32 %s79, 1
        %s169 = sand.u32 %s79, 1
        %s170 = smul.addr %s169, 8
        %s171 = scalar_lea.vmem [#allocation4], %s170
        %s172 = sshrl.u32 %s21, 3
        %s173 = sshrl.u32 %s21, 3
        %v174 = vld [vmem:[%s150] sm:$0xff]
        %175 = vst [vmem:[%s158] sm:$0xff] %v174
        %s176 = scalar_lea.vmem %s158, 8 [#allocation1]
        %s177 = scalar_lea.vmem %s150, 8 [#allocation0]
        %v178 = vld [vmem:[%s177] sm:$0xff]
        %179 = vst [vmem:[%s176] sm:$0xff] %v178
        %s180 = sand.u32 %s21, 7
        %s181 = scalar_lea.vmem %s165, %s180 [#allocation2]
        %s182 = sand.u32 %s21, 7
        %s183 = scalar_lea.vmem %s171, %s182 [#allocation4]
        %184 = vst [vmem:[%s181] sm:$0x1] 0
        %v185 = vlaneseq
        %v186 = vshrl.u32 %v185, 7
        %v187 = vmov %v186
        loop: start=0, step=1, limit=2
        $region40: #{custom-call.8} parent=38 // loop_pre_header
          _
        $region41: #{custom-call.8} parent=38 // loop_header
          %s189 = sphi 0, %s193
          %p190 = scmp.ge.s32.totalorder %s189, 2
        $region42: #{custom-call.8} parent=38 // loop_header_branch
          %192 = sbr.rel (%p190) target = $region46
        $region43: #{custom-call.8} parent=38 // loop_body
          %s194 = smul.addr %s189, 8
          %s195 = scalar_lea.vmem [#allocation5], %s194
          %s196 = smul.u32 %s189, 8
          %v197 = vstv %s196
          %v198 = vadd.s32 %v187, %v197
          %199 = vst [vmem:[%s195] sm:$0xff] %v198
        $region44: #{custom-call.8} parent=38 // loop_footer
          %s193 = sadd.s32 1, %s189
        $region45: #{custom-call.8} parent=38 // loop_footer_branch
          %188 = sbr.rel target = $region41
        $region46: #{custom-call.8} parent=38 // loop_exit
          _
        loop: start=0, step=1, limit=16
        $region47: #{custom-call.8} parent=38 // loop_pre_header
          _
        $region48: #{custom-call.8} parent=38 // loop_header
          %s201 = sphi 0, %s205
          %p202 = scmp.ge.s32.totalorder %s201, 16
        $region49: #{custom-call.8} parent=38 // loop_header_branch
          %204 = sbr.rel (%p202) target = $region53
        $region50: #{custom-call.8} parent=38 // loop_body
          %v206 = vstv %s201
          %v207 = vlaneseq
          %v208 = vshrl.u32 %v207, 7
          %v209 = vmov %v208
          %v210 = vld [vmem:[%s158] sm:$0xff]
          %v211 = vand.u32 2147483647, %v210
          %v213 = vstv %s201
          %vm214 = vcmp.ge.s32.totalorder %v209, %v213
          %vm215 = vcmp.lt.s32.totalorder %v209, 16
          %vm216 = vmand %vm214, %vm215
          %vm217 = vcmp.lt.f32.partialorder -inf, %v211
          %vm218 = vmand %vm216, %vm217
          %v219 = vsel %vm218, %v209, %v206
          %v220 = vsel %vm218, %v211, -inf
          %s221 = scalar_lea.vmem %s158, 8 [#allocation1]
          %v222 = vld [vmem:[%s221] sm:$0xff]
          %v223 = vand.u32 2147483647, %v222
          %v224 = vadd.s32 %v209, 8
          %v225 = vstv %s201
          %vm226 = vcmp.ge.s32.totalorder %v224, %v225
          %vm227 = vcmp.lt.s32.totalorder %v224, 16
          %vm228 = vmand %vm226, %vm227
          %vm229 = vcmp.lt.f32.partialorder %v220, %v223
          %vm230 = vmand %vm228, %vm229
          %v231 = vsel %vm230, %v224, %v219
          %v232 = vsel %vm230, %v223, %v220
          %v233 = vrot.slane %v232, 1
          %v234 = vrot.slane %v231, 1
          %vm235 = vcmp.ge.f32.partialorder %v233, %v232
          %v236 = vsel %vm235, %v233, %v232
          %v237 = vsel %vm235, %v234, %v231
          %v238 = vrot.slane %v233, 1
          %v239 = vrot.slane %v234, 1
          %vm240 = vcmp.ge.f32.partialorder %v238, %v236
          %v241 = vsel %vm240, %v238, %v236
          %v242 = vsel %vm240, %v239, %v237
          %v243 = vrot.slane %v238, 1
          %v244 = vrot.slane %v239, 1
          %vm245 = vcmp.ge.f32.partialorder %v243, %v241
          %v246 = vsel %vm245, %v243, %v241
          %v247 = vsel %vm245, %v244, %v242
          %v248 = vrot.slane %v243, 1
          %v249 = vrot.slane %v244, 1
          %vm250 = vcmp.ge.f32.partialorder %v248, %v246
          %v251 = vsel %vm250, %v248, %v246
          %v252 = vsel %vm250, %v249, %v247
          %v253 = vrot.slane %v248, 1
          %v254 = vrot.slane %v249, 1
          %vm255 = vcmp.ge.f32.partialorder %v253, %v251
          %v256 = vsel %vm255, %v253, %v251
          %v257 = vsel %vm255, %v254, %v252
          %v258 = vrot.slane %v253, 1
          %v259 = vrot.slane %v254, 1
          %vm260 = vcmp.ge.f32.partialorder %v258, %v256
          %v261 = vsel %vm260, %v258, %v256
          %v262 = vsel %vm260, %v259, %v257
          %v263 = vrot.slane %v258, 1
          %v264 = vrot.slane %v259, 1
          %vm265 = vcmp.ge.f32.partialorder %v263, %v261
          %v266 = vsel %vm265, %v263, %v261
          %v267 = vsel %vm265, %v264, %v262
          %s268 = ssub.s32 128, %s201
          %269 = vrot.lane.b32.xlu0 %v267, %s268
          %v270 = vpop.permute.xlu0 %269
          %s271 = vtos %v270
          %v272 = vstv %s201
          %v273 = vlaneseq
          %v274 = vand.u32 %v273, 127
          %vm275 = vcmp.eq.s32.totalorder %v274, %v272
          %v276 = vstv %s271
          %v277 = vld [vmem:[%s181] ss:$0 sm:$0xff]
          %v278 = vsel %vm275, %v276, %v277
          %279 = vst [vmem:[%s181] sm:$0x1] %v278
          %s280 = scalar_lea.vmem %s158, %s201 [#allocation1]
          %s281 = scalar_lea.vmem %s158, %s271 [#allocation1]
          %v282 = vld [vmem:[%s280] ss:$0 sm:$0xff]
          %v283 = vld [vmem:[%s281] ss:$0 sm:$0xff]
          %284 = vst [vmem:[%s281] sm:$0x1] %v282
          %285 = vst [vmem:[%s280] sm:$0x1] %v283
          %s286 = scalar_lea.vmem [#allocation5], %s201
          %s287 = scalar_lea.vmem [#allocation5], %s271
          %v288 = vld [vmem:[%s286] ss:$0 sm:$0xff]
          %v289 = vld [vmem:[%s287] ss:$0 sm:$0xff]
          %290 = vst [vmem:[%s287] sm:$0x1] %v288
          %291 = vst [vmem:[%s286] sm:$0x1] %v289
          %vm292 = vcmp.ne.f32.partialorder %v283, 0.0
          %vm293 = vmand %vm275, %vm292
          %v294 = vsel %vm293, %v283, 1.0
          %v295 = vlaneseq
          %v296 = vand.u32 %v295, 127
          %v297 = vstv %s201
          %vm298 = vcmp.gt.s32.totalorder %v296, %v297
          %v299 = vsel %vm298, %v283, 0.0
          %v300 = vlaneseq
          %v301 = vshrl.u32 %v300, 7
          %v302 = vmov %v301
          %v303 = vld [vmem:[%s158] sm:$0xff]
          %v305 = vstv %s201
          %vm306 = vcmp.gt.s32.totalorder %v302, %v305
          %v307 = vsel %vm306, %v294, 1.0
          %v308 = vrcp.pop %v307
          %v309 = vmul.f32 %v303, %v308
          %vm310 = vmand %vm306, %vm275
          %v311 = vsel %vm310, %v309, 0.0
          %312 = vadd.xlane.f32.xlu0 %v311
          %v313 = vpop.xlane.xlu0 %312
          %v314 = vmul.f32 %v313, %v299
          %v315 = vsub.f32 %v309, %v314
          %316 = vst [vmem:[%s158] sm:$0xff] %v315
          %s317 = scalar_lea.vmem %s158, 8 [#allocation1]
          %v318 = vld [vmem:[%s317] sm:$0xff]
          %v319 = vadd.s32 %v302, 8
          %v320 = vstv %s201
          %vm321 = vcmp.gt.s32.totalorder %v319, %v320
          %v322 = vsel %vm321, %v294, 1.0
          %v323 = vrcp.pop %v322
          %v324 = vmul.f32 %v318, %v323
          %vm325 = vmand %vm321, %vm275
          %v326 = vsel %vm325, %v324, 0.0
          %327 = vadd.xlane.f32.xlu0 %v326
          %v328 = vpop.xlane.xlu0 %327
          %v329 = vmul.f32 %v328, %v299
          %v330 = vsub.f32 %v324, %v329
          %331 = vst [vmem:[%s317] sm:$0xff] %v330
        $region51: #{custom-call.8} parent=38 // loop_footer
          %s205 = sadd.s32 1, %s201
        $region52: #{custom-call.8} parent=38 // loop_footer_branch
          %200 = sbr.rel target = $region48
        $region53: #{custom-call.8} parent=38 // loop_exit
          _
        %v332 = vld [vmem:[#allocation5] sm:$0xff]
        %s333 = scalar_lea.vmem [#allocation5], 8
        %v334 = vld [vmem:[%s333] sm:$0xff]
        %s335 = scalar_lea.vmem [#allocation5], 16
        %s336 = scalar_lea.vmem [#allocation5], 24
        %s337 = scalar_lea.vmem [#allocation5], 32
        %s338 = scalar_lea.vmem [#allocation5], 40
        %s339 = scalar_lea.vmem [#allocation5], 48
        %s340 = scalar_lea.vmem [#allocation5], 56
        %s341 = scalar_lea.vmem [#allocation5], 64
        %s342 = scalar_lea.vmem [#allocation5], 72
        %s343 = scalar_lea.vmem [#allocation5], 80
        %s344 = scalar_lea.vmem [#allocation5], 88
        %s345 = scalar_lea.vmem [#allocation5], 96
        %s346 = scalar_lea.vmem [#allocation5], 104
        %s347 = scalar_lea.vmem [#allocation5], 112
        %s348 = scalar_lea.vmem [#allocation5], 120
        %349 = vxpose.xlu0.b32.start [1/16] %v332, 128
        %350 = vxpose.xlu0.b32.cont [2/16] %v334, 128
        %351 = vxpose.xlu0.b32.cont [3/16] 0, 128
        %352 = vxpose.xlu0.b32.cont [4/16] 0, 128
        %353 = vxpose.xlu0.b32.cont [5/16] 0, 128
        %354 = vxpose.xlu0.b32.cont [6/16] 0, 128
        %355 = vxpose.xlu0.b32.cont [7/16] 0, 128
        %356 = vxpose.xlu0.b32.cont [8/16] 0, 128
        %357 = vxpose.xlu0.b32.cont [9/16] 0, 128
        %358 = vxpose.xlu0.b32.cont [10/16] 0, 128
        %359 = vxpose.xlu0.b32.cont [11/16] 0, 128
        %360 = vxpose.xlu0.b32.cont [12/16] 0, 128
        %361 = vxpose.xlu0.b32.cont [13/16] 0, 128
        %362 = vxpose.xlu0.b32.cont [14/16] 0, 128
        %363 = vxpose.xlu0.b32.cont [15/16] 0, 128
        %364 = vxpose.xlu0.b32.end [16/16] 0, 128
        %v365 = vpop.trf.xlu0
        %v366 = vpop.trf.xlu0
        %v367 = vpop.trf.xlu0
        %v368 = vpop.trf.xlu0
        %v369 = vpop.trf.xlu0
        %v370 = vpop.trf.xlu0
        %v371 = vpop.trf.xlu0
        %v372 = vpop.trf.xlu0
        %v373 = vpop.trf.xlu0
        %v374 = vpop.trf.xlu0
        %v375 = vpop.trf.xlu0
        %v376 = vpop.trf.xlu0
        %v377 = vpop.trf.xlu0
        %v378 = vpop.trf.xlu0
        %v379 = vpop.trf.xlu0
        %v380 = vpop.trf.xlu0
        %381 = vst [vmem:[%s183] sm:$0x1] %v365
        %s382 = sand.u32 %s14, 1
        %s383 = sand.u32 %s14, 1
        %s384 = smul.addr %s383, 16
        %s385 = scalar_lea.vmem [#allocation1], %s384
        %s386 = sand.u32 %s47, 1
        %s387 = scalar_lea.sflag [#allocation3], %s386
        %s388 = sand.u32 %s47, 1
        %s389 = smul.addr %s388, 8
        %s390 = scalar_lea.vmem [#allocation2], %s389
        %s391 = sand.u32 %s79, 1
        %s392 = sand.u32 %s79, 1
        %s393 = smul.addr %s392, 8
        %s394 = scalar_lea.vmem [#allocation4], %s393
        %s395 = smul.addr %s20, 10
        %s396 = sadd.s32 %s21, %s395
        %s397 = smul.addr %s19, 180
        %s398 = sadd.s32 %s396, %s397
        %s399 = smul.addr %s398, 16
        %s400 = scalar_lea.vmem %s1, %s399
        // Predicated region
        $region54: #{custom-call.8} parent=38 // pred_check
          _
        $region55: #{custom-call.8} parent=38 // pred_check_branch
          %402 = sbr.rel (0) target = $region57
        $region56: #{custom-call.8} parent=38 // pred_region
          // Predicated region
          $region58: #{custom-call.8} parent=56 // pred_check
            _
          $region59: #{custom-call.8} parent=56 // pred_check_branch
            %404 = sbr.rel (0) target = $region61
          $region60: #{custom-call.8} parent=56 // pred_region
            loop: start=0, step=1, limit=1
            $region62: #{custom-call.8} parent=60 // loop_pre_header
              _
            $region63: #{custom-call.8} parent=60 // loop_header
              %s406 = sphi 0, %s410
              %p407 = scmp.ge.s32.totalorder %s406, 1
              %s411 = sphi %s385, %s385
              %s412 = sphi %s400, %s400
            $region64: #{custom-call.8} parent=60 // loop_header_branch
              %409 = sbr.rel (%p407) target = $region68
            $region65: #{custom-call.8} parent=60 // loop_body
              %v413 = vld [vmem:[%s411] sm:$0xff]
              %414 = vst [vmem:[%s412] sm:$0xff] %v413
              %v415 = vld [vmem:[%s411 + $0x8] sm:$0xff]
              %416 = vst [vmem:[%s412 + $0x8] sm:$0xff] %v415
            $region66: #{custom-call.8} parent=60 // loop_footer
              %s410 = sadd.s32 1, %s406
            $region67: #{custom-call.8} parent=60 // loop_footer_branch
              %405 = sbr.rel target = $region63
            $region68: #{custom-call.8} parent=60 // loop_exit
              _
          $region61: #{custom-call.8} parent=56 // pred_fallthru
            _
          // Predicated region
          $region69: #{custom-call.8} parent=56 // pred_check
            _
          $region70: #{custom-call.8} parent=56 // pred_check_branch
            %418 = sbr.rel target = $region72
          $region71: #{custom-call.8} parent=56 // pred_region
            _
          $region72: #{custom-call.8} parent=56 // pred_fallthru
            _
        $region57: #{custom-call.8} parent=38 // pred_fallthru
          _
        %419 = vnop
        // Predicated region
        $region73: #{custom-call.8} parent=38 // pred_check
          %p420 = pneg %p57
        $region74: #{custom-call.8} parent=38 // pred_check_branch
          %422 = sbr.rel (%p420) target = $region76
        $region75: #{custom-call.8} parent=38 // pred_region
          %s423 = sshrl.u32 %s21, 3
          %s425 = ssub.s32 128, 128
          %426 = vsyncadd %s387, %s425
          %s427 = smul.addr %s20, 2
          %s428 = sadd.s32 %s423, %s427
          %s429 = smul.addr %s19, 36
          %s430 = sadd.s32 %s428, %s429
          %s431 = smul.addr %s430, 128
          %s432 = scalar_lea.hbm %s2, %s431
          %s434 = sshll.u32 %s390, 4
          %s435 = int_to_ptr.vmem [resolvable:$true] %s434
          %437 = dma.vmem_to_hbm [thread:$0]  %s435, 128, %s432, %s387
        $region76: #{custom-call.8} parent=38 // pred_fallthru
          _
        // Predicated region
        $region77: #{custom-call.8} parent=38 // pred_check
          %p438 = pneg %p89
        $region78: #{custom-call.8} parent=38 // pred_check_branch
          %440 = sbr.rel (%p438) target = $region80
        $region79: #{custom-call.8} parent=38 // pred_region
          %s441 = sshrl.u32 %s21, 3
          %s442 = smul.addr %s20, 2
          %s443 = sadd.s32 %s441, %s442
          %s444 = smul.addr %s19, 36
          %s445 = sadd.s32 %s443, %s444
          %s446 = smul.addr %s445, 8
          %s447 = scalar_lea.vmem %s3, %s446
          // Predicated region
          $region81: #{custom-call.8} parent=79 // pred_check
            _
          $region82: #{custom-call.8} parent=79 // pred_check_branch
            %449 = sbr.rel (0) target = $region84
          $region83: #{custom-call.8} parent=79 // pred_region
            // Predicated region
            $region85: #{custom-call.8} parent=83 // pred_check
              _
            $region86: #{custom-call.8} parent=83 // pred_check_branch
              %451 = sbr.rel (0) target = $region88
            $region87: #{custom-call.8} parent=83 // pred_region
              // Predicated region
              $region100: #{custom-call.8} parent=87 // pred_check
                _
              $region101: #{custom-call.8} parent=87 // pred_check_branch
                %467 = sbr.rel (0) target = $region103
              $region102: #{custom-call.8} parent=87 // pred_region
                loop: start=0, step=1, limit=1
                $region104: #{custom-call.8} parent=102 // loop_pre_header
                  _
                $region105: #{custom-call.8} parent=102 // loop_header
                  %s469 = sphi 0, %s473
                  %p470 = scmp.ge.s32.totalorder %s469, 1
                  %s474 = sphi %s394, %s394
                  %s475 = sphi %s447, %s447
                $region106: #{custom-call.8} parent=102 // loop_header_branch
                  %472 = sbr.rel (%p470) target = $region110
                $region107: #{custom-call.8} parent=102 // loop_body
                  %v476 = vld [vmem:[%s474] sm:$0xff]
                  %477 = vst [vmem:[%s475] sm:$0xff] %v476
                $region108: #{custom-call.8} parent=102 // loop_footer
                  %s473 = sadd.s32 1, %s469
                $region109: #{custom-call.8} parent=102 // loop_footer_branch
                  %468 = sbr.rel target = $region105
                $region110: #{custom-call.8} parent=102 // loop_exit
                  _
              $region103: #{custom-call.8} parent=87 // pred_fallthru
                _
              // Predicated region
              $region111: #{custom-call.8} parent=87 // pred_check
                _
              $region112: #{custom-call.8} parent=87 // pred_check_branch
                %479 = sbr.rel target = $region114
              $region113: #{custom-call.8} parent=87 // pred_region
                _
              $region114: #{custom-call.8} parent=87 // pred_fallthru
                _
            $region88: #{custom-call.8} parent=83 // pred_fallthru
              _
            // Predicated region
            $region89: #{custom-call.8} parent=83 // pred_check
              _
            $region90: #{custom-call.8} parent=83 // pred_check_branch
              %453 = sbr.rel target = $region92
            $region91: #{custom-call.8} parent=83 // pred_region
              %s455 = ssub.s32 256, 1
              loop: start=0, step=1, limit=1
              $region93: #{custom-call.8} parent=91 // loop_pre_header
                _
              $region94: #{custom-call.8} parent=91 // loop_header
                %s457 = sphi 0, %s461
                %p458 = scmp.ge.s32.totalorder %s457, 1
                %s462 = sphi %s394, %s394
                %s463 = sphi %s447, %s447
              $region95: #{custom-call.8} parent=91 // loop_header_branch
                %460 = sbr.rel (%p458) target = $region99
              $region96: #{custom-call.8} parent=91 // loop_body
                %v464 = vld [vmem:[%s462] sm:%s455]
                %465 = vst [vmem:[%s463] sm:%s455] %v464
              $region97: #{custom-call.8} parent=91 // loop_footer
                %s461 = sadd.s32 1, %s457
              $region98: #{custom-call.8} parent=91 // loop_footer_branch
                %456 = sbr.rel target = $region94
              $region99: #{custom-call.8} parent=91 // loop_exit
                _
            $region92: #{custom-call.8} parent=83 // pred_fallthru
              _
          $region84: #{custom-call.8} parent=79 // pred_fallthru
            _
          %480 = vnop
        $region80: #{custom-call.8} parent=38 // pred_fallthru
          _
      $region39: #{custom-call.8} parent=5 // pred_fallthru
        _
      %p481 = scmp.le.s32.totalorder 2, %s9
      // Predicated region
      $region115: #{custom-call.8} parent=5 // pred_check
        %p482 = pneg %p481
      $region116: #{custom-call.8} parent=5 // pred_check_branch
        %484 = sbr.rel (%p482) target = $region118
      $region117: #{custom-call.8} parent=5 // pred_region
        %s485 = ssub.s32 %s9, 2
        %s486 = sand.u32 %s15, 1
        %s487 = sand.u32 %s15, 1
        %s488 = smul.addr %s487, 16
        %s489 = scalar_lea.vmem [#allocation1], %s488
        // Predicated region
        $region119: #{custom-call.8} parent=117 // pred_check
          %p490 = pneg %p63
        $region120: #{custom-call.8} parent=117 // pred_check_branch
          %492 = sbr.rel (%p490) target = $region122
        $region121: #{custom-call.8} parent=117 // pred_region
          %s493 = sand.u32 %s48, 1
          %s494 = scalar_lea.sflag [#allocation3], %s493
          %s495 = sand.u32 %s48, 1
          %s496 = smul.addr %s495, 8
          %s497 = scalar_lea.vmem [#allocation2], %s496
          %498 = dma.done %s494, 128
        $region122: #{custom-call.8} parent=117 // pred_fallthru
          _
        // Predicated region
        $region123: #{custom-call.8} parent=117 // pred_check
          %p499 = pneg %p95
        $region124: #{custom-call.8} parent=117 // pred_check_branch
          %501 = sbr.rel (%p499) target = $region126
        $region125: #{custom-call.8} parent=117 // pred_region
          %s502 = sand.u32 %s80, 1
          %s503 = sand.u32 %s80, 1
          %s504 = smul.addr %s503, 8
          %s505 = scalar_lea.vmem [#allocation4], %s504
        $region126: #{custom-call.8} parent=117 // pred_fallthru
          _
      $region118: #{custom-call.8} parent=5 // pred_fallthru
        _
    $region6: #{custom-call.8} parent=1 // loop_footer
      %s13 = sadd.s32 1, %s9
    $region7: #{custom-call.8} parent=1 // loop_footer_branch
      %8 = sbr.rel target = $region3
    $region8: #{custom-call.8} parent=1 // loop_exit
      _
    %506 = vsyncpa [#allocation3], 1
    %s507 = scalar_lea.sflag [#allocation3], 1
    %508 = vsyncpa %s507, 1

// kernel: custom-call.10
$region0: #{custom-call.10}
  %s0 = inlined_call_operand.vmem [shape: f32[3,18,10,1,16,16], index: 0, kind: input, shape index: {}]
  %s1 = inlined_call_operand.vmem [shape: f32[3,18,10,1,16,16], index: 1, kind: output, shape index: {}]
  $region1: #{custom-call.10} parent=0
    #allocation0 [shape = 'u8[16384]{0}', space=vmem, size = 0x4000, scoped, tag = 'operand span for operand 0']
    #allocation1 [shape = 'u8[16384]{0}', space=vmem, size = 0x4000, scoped, tag = 'operand span for operand 1']
    loop: start=0, step=1, limit=542
    $region2: #{custom-call.10} parent=1 // loop_pre_header
      _
    $region3: #{custom-call.10} parent=1 // loop_header
      %s3 = sphi 0, %s7
      %p4 = scmp.ge.s32.totalorder %s3, 542
      %s10 = sphi 0, %s50
      %s11 = sphi 0, %s46
      %s12 = sphi 0, %s42
      %s13 = sphi 0, %s38
      %s14 = sphi 0, %s34
      %s15 = sphi 0, %s30
      %s16 = sphi 0, %s10
      %s17 = sphi 0, %s11
      %s18 = sphi 0, %s12
      %s19 = sphi 0, %s13
      %s20 = sphi 0, %s14
      %s21 = sphi 0, %s15
      %s22 = sphi 0, %s16
      %s23 = sphi 0, %s17
      %s24 = sphi 0, %s18
      %s25 = sphi 0, %s19
      %s26 = sphi 0, %s20
      %s27 = sphi 0, %s21
    $region4: #{custom-call.10} parent=1 // loop_header_branch
      %6 = sbr.rel (%p4) target = $region8
    $region5: #{custom-call.10} parent=1 // loop_body
      %s8 = ssub.s32 %s3, 1
      %s9 = ssub.s32 %s3, 2
      %s28 = sadd.s32 1, %s15
      %p29 = scmp.ge.s32.totalorder %s28, 1
      %s30 = scalar_select %p29, 0, %s28
      %s31 = sadd.s32 1, %s14
      %s32 = scalar_select %p29, %s31, %s14
      %p33 = scmp.ge.s32.totalorder %s32, 1
      %s34 = scalar_select %p33, 0, %s32
      %s35 = sadd.s32 1, %s13
      %s36 = scalar_select %p33, %s35, %s13
      %p37 = scmp.ge.s32.totalorder %s36, 1
      %s38 = scalar_select %p37, 0, %s36
      %s39 = sadd.s32 1, %s12
      %s40 = scalar_select %p37, %s39, %s12
      %p41 = scmp.ge.s32.totalorder %s40, 10
      %s42 = scalar_select %p41, 0, %s40
      %s43 = sadd.s32 1, %s11
      %s44 = scalar_select %p41, %s43, %s11
      %p45 = scmp.ge.s32.totalorder %s44, 18
      %s46 = scalar_select %p45, 0, %s44
      %s47 = sadd.s32 1, %s10
      %s48 = scalar_select %p45, %s47, %s10
      %p49 = scmp.ge.s32.totalorder %s48, 3
      %s50 = scalar_select %p49, 0, %s48
      %p51 = scmp.le.s32.totalorder 1, %s3
      %p52 = scmp.lt.s32.totalorder %s3, 541
      %p53 = pnand %p51, %p52
      %p54 = pneg %p53
      // Predicated region
      $region9: #{custom-call.10} parent=5 // pred_check
        _
      $region10: #{custom-call.10} parent=5 // pred_check_branch
        %56 = sbr.rel (%p53) target = $region12
      $region11: #{custom-call.10} parent=5 // pred_region
        %s57 = ssub.s32 %s3, 1
      $region12: #{custom-call.10} parent=5 // pred_fallthru
        _
      %p58 = scmp.lt.s32.totalorder %s3, 540
      // Predicated region
      $region13: #{custom-call.10} parent=5 // pred_check
        %p59 = pneg %p58
      $region14: #{custom-call.10} parent=5 // pred_check_branch
        %61 = sbr.rel (%p59) target = $region16
      $region15: #{custom-call.10} parent=5 // pred_region
        %s62 = sand.u32 %s3, 1
        %s63 = sand.u32 %s3, 1
        %s64 = smul.addr %s63, 16
        %s65 = scalar_lea.vmem [#allocation0], %s64
        %s66 = sadd.s32 %s15, %s14
        %s67 = smul.addr %s13, 2
        %s68 = sadd.s32 %s66, %s67
        %s69 = smul.addr %s12, 2
        %s70 = sadd.s32 %s68, %s69
        %s71 = smul.addr %s11, 20
        %s72 = sadd.s32 %s70, %s71
        %s73 = smul.addr %s10, 360
        %s74 = sadd.s32 %s72, %s73
        %s75 = smul.addr %s74, 8
        %s76 = scalar_lea.vmem %s0, %s75
        // Predicated region
        $region17: #{custom-call.10} parent=15 // pred_check
          _
        $region18: #{custom-call.10} parent=15 // pred_check_branch
          %78 = sbr.rel (0) target = $region20
        $region19: #{custom-call.10} parent=15 // pred_region
          // Predicated region
          $region21: #{custom-call.10} parent=19 // pred_check
            _
          $region22: #{custom-call.10} parent=19 // pred_check_branch
            %80 = sbr.rel (0) target = $region24
          $region23: #{custom-call.10} parent=19 // pred_region
            // Predicated region
            $region36: #{custom-call.10} parent=23 // pred_check
              _
            $region37: #{custom-call.10} parent=23 // pred_check_branch
              %98 = sbr.rel (0) target = $region39
            $region38: #{custom-call.10} parent=23 // pred_region
              loop: start=0, step=1, limit=1
              $region40: #{custom-call.10} parent=38 // loop_pre_header
                _
              $region41: #{custom-call.10} parent=38 // loop_header
                %s100 = sphi 0, %s104
                %p101 = scmp.ge.s32.totalorder %s100, 1
                %s105 = sphi %s76, %s76
                %s106 = sphi %s65, %s65
              $region42: #{custom-call.10} parent=38 // loop_header_branch
                %103 = sbr.rel (%p101) target = $region46
              $region43: #{custom-call.10} parent=38 // loop_body
                %v107 = vld [vmem:[%s105] sm:$0xff]
                %108 = vst [vmem:[%s106] sm:$0xff] %v107
                %v109 = vld [vmem:[%s105 + $0x8] sm:$0xff]
                %110 = vst [vmem:[%s106 + $0x8] sm:$0xff] %v109
              $region44: #{custom-call.10} parent=38 // loop_footer
                %s104 = sadd.s32 1, %s100
              $region45: #{custom-call.10} parent=38 // loop_footer_branch
                %99 = sbr.rel target = $region41
              $region46: #{custom-call.10} parent=38 // loop_exit
                _
            $region39: #{custom-call.10} parent=23 // pred_fallthru
              _
            // Predicated region
            $region47: #{custom-call.10} parent=23 // pred_check
              _
            $region48: #{custom-call.10} parent=23 // pred_check_branch
              %112 = sbr.rel target = $region50
            $region49: #{custom-call.10} parent=23 // pred_region
              _
            $region50: #{custom-call.10} parent=23 // pred_fallthru
              _
          $region24: #{custom-call.10} parent=19 // pred_fallthru
            _
          // Predicated region
          $region25: #{custom-call.10} parent=19 // pred_check
            _
          $region26: #{custom-call.10} parent=19 // pred_check_branch
            %82 = sbr.rel target = $region28
          $region27: #{custom-call.10} parent=19 // pred_region
            %s84 = ssub.s32 256, 1
            loop: start=0, step=1, limit=1
            $region29: #{custom-call.10} parent=27 // loop_pre_header
              _
            $region30: #{custom-call.10} parent=27 // loop_header
              %s86 = sphi 0, %s90
              %p87 = scmp.ge.s32.totalorder %s86, 1
              %s91 = sphi %s76, %s76
              %s92 = sphi %s65, %s65
            $region31: #{custom-call.10} parent=27 // loop_header_branch
              %89 = sbr.rel (%p87) target = $region35
            $region32: #{custom-call.10} parent=27 // loop_body
              %v93 = vld [vmem:[%s91] sm:%s84]
              %94 = vst [vmem:[%s92] sm:%s84] %v93
              %v95 = vld [vmem:[%s91 + $0x8] sm:%s84]
              %96 = vst [vmem:[%s92 + $0x8] sm:%s84] %v95
            $region33: #{custom-call.10} parent=27 // loop_footer
              %s90 = sadd.s32 1, %s86
            $region34: #{custom-call.10} parent=27 // loop_footer_branch
              %85 = sbr.rel target = $region30
            $region35: #{custom-call.10} parent=27 // loop_exit
              _
          $region28: #{custom-call.10} parent=19 // pred_fallthru
            _
        $region20: #{custom-call.10} parent=15 // pred_fallthru
          _
        %113 = vnop
      $region16: #{custom-call.10} parent=5 // pred_fallthru
        _
      %p114 = scmp.le.s32.totalorder 1, %s3
      %p115 = scmp.lt.s32.totalorder %s3, 541
      %p116 = pnand %p114, %p115
      %p117 = pneg %p116
      // Predicated region
      $region51: #{custom-call.10} parent=5 // pred_check
        _
      $region52: #{custom-call.10} parent=5 // pred_check_branch
        %119 = sbr.rel (%p116) target = $region54
      $region53: #{custom-call.10} parent=5 // pred_region
        #allocation2 [shape = 'f32[16,16]{1,0}', space=vmem, size = 0x2000, scoped, tag = 'rescaled input a']
        %s120 = ssub.s32 %s3, 1
        %s121 = sand.u32 %s8, 1
        %s122 = sand.u32 %s8, 1
        %s123 = smul.addr %s122, 16
        %s124 = scalar_lea.vmem [#allocation0], %s123
        %s125 = sand.u32 %s8, 1
        %s126 = sand.u32 %s8, 1
        %s127 = smul.addr %s126, 16
        %s128 = scalar_lea.vmem [#allocation0], %s127
        %s129 = sand.u32 %s8, 1
        %s130 = sand.u32 %s8, 1
        %s131 = smul.addr %s130, 16
        %s132 = scalar_lea.vmem [#allocation1], %s131
        %v133 = vlaneseq
        %v134 = vand.u32 %v133, 127
        %vm135 = vcmp.lt.s32.totalorder %v134, 16
        %v136 = vlaneseq
        %v137 = vshrl.u32 %v136, 7
        %vm139 = vcmp.eq.s32.totalorder %v137, %v134
        %v140 = vld [vmem:[%s124] sm:$0xff]
        %v141 = vsel %vm139, %v140, 0.0
        %142 = vadd.xlane.f32.xlu0 %v141
        %v143 = vpop.xlane.xlu0 %142
        %vm144 = vcmp.ge.s32.totalorder %v137, %v134
        %vm145 = vmand %vm144, %vm135
        %v146 = vsel %vm145, %v140, 0.0
        %v147 = vrcp.pop %v143
        %v148 = vmul.f32 %v146, %v147
        %149 = vst [vmem:[#allocation2] sm:$0xff] %v148
        %s150 = scalar_lea.vmem %s124, 8 [#allocation0]
        %s151 = scalar_lea.vmem [#allocation2], 8
        %v152 = vlaneseq
        %v153 = vshrl.u32 %v152, 7
        %v154 = vadd.s32 %v153, 8
        %vm155 = vcmp.eq.s32.totalorder %v154, %v134
        %v156 = vld [vmem:[%s150] sm:$0xff]
        %v157 = vsel %vm155, %v156, 0.0
        %158 = vadd.xlane.f32.xlu0 %v157
        %v159 = vpop.xlane.xlu0 %158
        %vm160 = vcmp.ge.s32.totalorder %v154, %v134
        %vm161 = vmand %vm160, %vm135
        %v162 = vsel %vm161, %v156, 0.0
        %v163 = vrcp.pop %v159
        %v164 = vmul.f32 %v162, %v163
        %165 = vst [vmem:[%s151] sm:$0xff] %v164
        %v166 = vlaneseq
        %v167 = vand.u32 %v166, 127
        %v168 = vlaneseq
        %v169 = vshrl.u32 %v168, 7
        %vm171 = vcmp.eq.s32.totalorder %v167, %v169
        %v172 = vlaneseq
        %v173 = vand.u32 %v172, 127
        %vm174 = vcmp.eq.s32.totalorder %v173, 0
        %v175 = vsel %vm174, 1.0, -1.0
        %v176 = vsel %vm171, %v175, 0.0
        %v177 = vlaneseq
        %v178 = vand.u32 %v177, 127
        %v179 = vlaneseq
        %v180 = vshrl.u32 %v179, 7
        %v181 = vadd.s32 %v180, 8
        %vm182 = vcmp.eq.s32.totalorder %v178, %v181
        %v183 = vsel %vm182, -1.0, 0.0
        %s184 = scalar_lea.vmem [#allocation2], 1
        %v185 = vld [vmem:[%s184] ss:$0 sm:$0xff]
        %v186 = vxor.u32 %v185, 2147483648
        %v187 = vlaneseq
        %v188 = vand.u32 %v187, 127
        %vm189 = vcmp.eq.s32.totalorder %v188, 1
        %v190 = vmul.f32 %v186, %v176
        %191 = vadd.xlane.f32.xlu0 %v190
        %v192 = vpop.xlane.xlu0 %191
        %v193 = vsel %vm189, %v192, %v176
        %s194 = scalar_lea.vmem [#allocation2], 2
        %v195 = vld [vmem:[%s194] ss:$0 sm:$0xff]
        %v196 = vxor.u32 %v195, 2147483648
        %v197 = vlaneseq
        %v198 = vand.u32 %v197, 127
        %vm199 = vcmp.eq.s32.totalorder %v198, 2
        %v200 = vmul.f32 %v196, %v193
        %201 = vadd.xlane.f32.xlu0 %v200
        %v202 = vpop.xlane.xlu0 %201
        %v203 = vsel %vm199, %v202, %v193
        %s204 = scalar_lea.vmem [#allocation2], 3
        %v205 = vld [vmem:[%s204] ss:$0 sm:$0xff]
        %v206 = vxor.u32 %v205, 2147483648
        %v207 = vlaneseq
        %v208 = vand.u32 %v207, 127
        %vm209 = vcmp.eq.s32.totalorder %v208, 3
        %v210 = vmul.f32 %v206, %v203
        %211 = vadd.xlane.f32.xlu0 %v210
        %v212 = vpop.xlane.xlu0 %211
        %v213 = vsel %vm209, %v212, %v203
        %s214 = scalar_lea.vmem [#allocation2], 4
        %v215 = vld [vmem:[%s214] ss:$0 sm:$0xff]
        %v216 = vxor.u32 %v215, 2147483648
        %v217 = vlaneseq
        %v218 = vand.u32 %v217, 127
        %vm219 = vcmp.eq.s32.totalorder %v218, 4
        %v220 = vmul.f32 %v216, %v213
        %221 = vadd.xlane.f32.xlu0 %v220
        %v222 = vpop.xlane.xlu0 %221
        %v223 = vsel %vm219, %v222, %v213
        %s224 = scalar_lea.vmem [#allocation2], 5
        %v225 = vld [vmem:[%s224] ss:$0 sm:$0xff]
        %v226 = vxor.u32 %v225, 2147483648
        %v227 = vlaneseq
        %v228 = vand.u32 %v227, 127
        %vm229 = vcmp.eq.s32.totalorder %v228, 5
        %v230 = vmul.f32 %v226, %v223
        %231 = vadd.xlane.f32.xlu0 %v230
        %v232 = vpop.xlane.xlu0 %231
        %v233 = vsel %vm229, %v232, %v223
        %s234 = scalar_lea.vmem [#allocation2], 6
        %v235 = vld [vmem:[%s234] ss:$0 sm:$0xff]
        %v236 = vxor.u32 %v235, 2147483648
        %v237 = vlaneseq
        %v238 = vand.u32 %v237, 127
        %vm239 = vcmp.eq.s32.totalorder %v238, 6
        %v240 = vmul.f32 %v236, %v233
        %241 = vadd.xlane.f32.xlu0 %v240
        %v242 = vpop.xlane.xlu0 %241
        %v243 = vsel %vm239, %v242, %v233
        %s244 = scalar_lea.vmem [#allocation2], 7
        %v245 = vld [vmem:[%s244] ss:$0 sm:$0xff]
        %v246 = vxor.u32 %v245, 2147483648
        %v247 = vlaneseq
        %v248 = vand.u32 %v247, 127
        %vm249 = vcmp.eq.s32.totalorder %v248, 7
        %v250 = vmul.f32 %v246, %v243
        %251 = vadd.xlane.f32.xlu0 %v250
        %v252 = vpop.xlane.xlu0 %251
        %v253 = vsel %vm249, %v252, %v243
        %s254 = scalar_lea.vmem [#allocation2], 8
        %v255 = vld [vmem:[%s254] ss:$0 sm:$0xff]
        %v256 = vxor.u32 %v255, 2147483648
        %v257 = vlaneseq
        %v258 = vand.u32 %v257, 127
        %vm259 = vcmp.eq.s32.totalorder %v258, 8
        %v260 = vmul.f32 %v256, %v253
        %261 = vadd.xlane.f32.xlu0 %v260
        %v262 = vpop.xlane.xlu0 %261
        %v263 = vsel %vm259, %v262, %v253
        %v264 = vmul.f32 %v256, %v183
        %265 = vadd.xlane.f32.xlu0 %v264
        %v266 = vpop.xlane.xlu0 %265
        %v267 = vsel %vm259, %v266, %v183
        %s268 = scalar_lea.vmem [#allocation2], 9
        %v269 = vld [vmem:[%s268] ss:$0 sm:$0xff]
        %v270 = vxor.u32 %v269, 2147483648
        %v271 = vlaneseq
        %v272 = vand.u32 %v271, 127
        %vm273 = vcmp.eq.s32.totalorder %v272, 9
        %v274 = vmul.f32 %v270, %v263
        %275 = vadd.xlane.f32.xlu0 %v274
        %v276 = vpop.xlane.xlu0 %275
        %v277 = vsel %vm273, %v276, %v263
        %v278 = vmul.f32 %v270, %v267
        %279 = vadd.xlane.f32.xlu0 %v278
        %v280 = vpop.xlane.xlu0 %279
        %v281 = vsel %vm273, %v280, %v267
        %s282 = scalar_lea.vmem [#allocation2], 10
        %v283 = vld [vmem:[%s282] ss:$0 sm:$0xff]
        %v284 = vxor.u32 %v283, 2147483648
        %v285 = vlaneseq
        %v286 = vand.u32 %v285, 127
        %vm287 = vcmp.eq.s32.totalorder %v286, 10
        %v288 = vmul.f32 %v284, %v277
        %289 = vadd.xlane.f32.xlu0 %v288
        %v290 = vpop.xlane.xlu0 %289
        %v291 = vsel %vm287, %v290, %v277
        %v292 = vmul.f32 %v284, %v281
        %293 = vadd.xlane.f32.xlu0 %v292
        %v294 = vpop.xlane.xlu0 %293
        %v295 = vsel %vm287, %v294, %v281
        %s296 = scalar_lea.vmem [#allocation2], 11
        %v297 = vld [vmem:[%s296] ss:$0 sm:$0xff]
        %v298 = vxor.u32 %v297, 2147483648
        %v299 = vlaneseq
        %v300 = vand.u32 %v299, 127
        %vm301 = vcmp.eq.s32.totalorder %v300, 11
        %v302 = vmul.f32 %v298, %v291
        %303 = vadd.xlane.f32.xlu0 %v302
        %v304 = vpop.xlane.xlu0 %303
        %v305 = vsel %vm301, %v304, %v291
        %v306 = vmul.f32 %v298, %v295
        %307 = vadd.xlane.f32.xlu0 %v306
        %v308 = vpop.xlane.xlu0 %307
        %v309 = vsel %vm301, %v308, %v295
        %s310 = scalar_lea.vmem [#allocation2], 12
        %v311 = vld [vmem:[%s310] ss:$0 sm:$0xff]
        %v312 = vxor.u32 %v311, 2147483648
        %v313 = vlaneseq
        %v314 = vand.u32 %v313, 127
        %vm315 = vcmp.eq.s32.totalorder %v314, 12
        %v316 = vmul.f32 %v312, %v305
        %317 = vadd.xlane.f32.xlu0 %v316
        %v318 = vpop.xlane.xlu0 %317
        %v319 = vsel %vm315, %v318, %v305
        %v320 = vmul.f32 %v312, %v309
        %321 = vadd.xlane.f32.xlu0 %v320
        %v322 = vpop.xlane.xlu0 %321
        %v323 = vsel %vm315, %v322, %v309
        %s324 = scalar_lea.vmem [#allocation2], 13
        %v325 = vld [vmem:[%s324] ss:$0 sm:$0xff]
        %v326 = vxor.u32 %v325, 2147483648
        %v327 = vlaneseq
        %v328 = vand.u32 %v327, 127
        %vm329 = vcmp.eq.s32.totalorder %v328, 13
        %v330 = vmul.f32 %v326, %v319
        %331 = vadd.xlane.f32.xlu0 %v330
        %v332 = vpop.xlane.xlu0 %331
        %v333 = vsel %vm329, %v332, %v319
        %v334 = vmul.f32 %v326, %v323
        %335 = vadd.xlane.f32.xlu0 %v334
        %v336 = vpop.xlane.xlu0 %335
        %v337 = vsel %vm329, %v336, %v323
        %s338 = scalar_lea.vmem [#allocation2], 14
        %v339 = vld [vmem:[%s338] ss:$0 sm:$0xff]
        %v340 = vxor.u32 %v339, 2147483648
        %v341 = vlaneseq
        %v342 = vand.u32 %v341, 127
        %vm343 = vcmp.eq.s32.totalorder %v342, 14
        %v344 = vmul.f32 %v340, %v333
        %345 = vadd.xlane.f32.xlu0 %v344
        %v346 = vpop.xlane.xlu0 %345
        %v347 = vsel %vm343, %v346, %v333
        %v348 = vmul.f32 %v340, %v337
        %349 = vadd.xlane.f32.xlu0 %v348
        %v350 = vpop.xlane.xlu0 %349
        %v351 = vsel %vm343, %v350, %v337
        %s352 = scalar_lea.vmem [#allocation2], 15
        %v353 = vld [vmem:[%s352] ss:$0 sm:$0xff]
        %v354 = vxor.u32 %v353, 2147483648
        %v355 = vlaneseq
        %v356 = vand.u32 %v355, 127
        %vm357 = vcmp.eq.s32.totalorder %v356, 15
        %v358 = vmul.f32 %v354, %v347
        %359 = vadd.xlane.f32.xlu0 %v358
        %v360 = vpop.xlane.xlu0 %359
        %v361 = vsel %vm357, %v360, %v347
        %v362 = vmul.f32 %v354, %v351
        %363 = vadd.xlane.f32.xlu0 %v362
        %v364 = vpop.xlane.xlu0 %363
        %v365 = vsel %vm357, %v364, %v351
        %v366 = vrcp.pop %v143
        %v367 = vmul.f32 %v361, %v366
        %vm368 = vweird.f32 %v143
        %v369 = vsel %vm368, %v361, %v367
        %370 = vst [vmem:[%s132] sm:$0xff] %v369
        %v371 = vrcp.pop %v159
        %v372 = vmul.f32 %v365, %v371
        %vm373 = vweird.f32 %v159
        %v374 = vsel %vm373, %v365, %v372
        %s375 = scalar_lea.vmem %s132, 8 [#allocation1]
        %376 = vst [vmem:[%s375] sm:$0xff] %v374
        %s377 = sand.u32 %s8, 1
        %s378 = sand.u32 %s8, 1
        %s379 = smul.addr %s378, 16
        %s380 = scalar_lea.vmem [#allocation1], %s379
        %s381 = sadd.s32 %s21, %s20
        %s382 = smul.addr %s19, 2
        %s383 = sadd.s32 %s381, %s382
        %s384 = smul.addr %s18, 2
        %s385 = sadd.s32 %s383, %s384
        %s386 = smul.addr %s17, 20
        %s387 = sadd.s32 %s385, %s386
        %s388 = smul.addr %s16, 360
        %s389 = sadd.s32 %s387, %s388
        %s390 = smul.addr %s389, 8
        %s391 = scalar_lea.vmem %s1, %s390
        // Predicated region
        $region55: #{custom-call.10} parent=53 // pred_check
          _
        $region56: #{custom-call.10} parent=53 // pred_check_branch
          %393 = sbr.rel (0) target = $region58
        $region57: #{custom-call.10} parent=53 // pred_region
          // Predicated region
          $region59: #{custom-call.10} parent=57 // pred_check
            _
          $region60: #{custom-call.10} parent=57 // pred_check_branch
            %395 = sbr.rel (0) target = $region62
          $region61: #{custom-call.10} parent=57 // pred_region
            // Predicated region
            $region74: #{custom-call.10} parent=61 // pred_check
              _
            $region75: #{custom-call.10} parent=61 // pred_check_branch
              %413 = sbr.rel (0) target = $region77
            $region76: #{custom-call.10} parent=61 // pred_region
              loop: start=0, step=1, limit=1
              $region78: #{custom-call.10} parent=76 // loop_pre_header
                _
              $region79: #{custom-call.10} parent=76 // loop_header
                %s415 = sphi 0, %s419
                %p416 = scmp.ge.s32.totalorder %s415, 1
                %s420 = sphi %s380, %s380
                %s421 = sphi %s391, %s391
              $region80: #{custom-call.10} parent=76 // loop_header_branch
                %418 = sbr.rel (%p416) target = $region84
              $region81: #{custom-call.10} parent=76 // loop_body
                %v422 = vld [vmem:[%s420] sm:$0xff]
                %423 = vst [vmem:[%s421] sm:$0xff] %v422
                %v424 = vld [vmem:[%s420 + $0x8] sm:$0xff]
                %425 = vst [vmem:[%s421 + $0x8] sm:$0xff] %v424
              $region82: #{custom-call.10} parent=76 // loop_footer
                %s419 = sadd.s32 1, %s415
              $region83: #{custom-call.10} parent=76 // loop_footer_branch
                %414 = sbr.rel target = $region79
              $region84: #{custom-call.10} parent=76 // loop_exit
                _
            $region77: #{custom-call.10} parent=61 // pred_fallthru
              _
            // Predicated region
            $region85: #{custom-call.10} parent=61 // pred_check
              _
            $region86: #{custom-call.10} parent=61 // pred_check_branch
              %427 = sbr.rel target = $region88
            $region87: #{custom-call.10} parent=61 // pred_region
              _
            $region88: #{custom-call.10} parent=61 // pred_fallthru
              _
          $region62: #{custom-call.10} parent=57 // pred_fallthru
            _
          // Predicated region
          $region63: #{custom-call.10} parent=57 // pred_check
            _
          $region64: #{custom-call.10} parent=57 // pred_check_branch
            %397 = sbr.rel target = $region66
          $region65: #{custom-call.10} parent=57 // pred_region
            %s399 = ssub.s32 256, 1
            loop: start=0, step=1, limit=1
            $region67: #{custom-call.10} parent=65 // loop_pre_header
              _
            $region68: #{custom-call.10} parent=65 // loop_header
              %s401 = sphi 0, %s405
              %p402 = scmp.ge.s32.totalorder %s401, 1
              %s406 = sphi %s380, %s380
              %s407 = sphi %s391, %s391
            $region69: #{custom-call.10} parent=65 // loop_header_branch
              %404 = sbr.rel (%p402) target = $region73
            $region70: #{custom-call.10} parent=65 // loop_body
              %v408 = vld [vmem:[%s406] sm:%s399]
              %409 = vst [vmem:[%s407] sm:%s399] %v408
              %v410 = vld [vmem:[%s406 + $0x8] sm:%s399]
              %411 = vst [vmem:[%s407 + $0x8] sm:%s399] %v410
            $region71: #{custom-call.10} parent=65 // loop_footer
              %s405 = sadd.s32 1, %s401
            $region72: #{custom-call.10} parent=65 // loop_footer_branch
              %400 = sbr.rel target = $region68
            $region73: #{custom-call.10} parent=65 // loop_exit
              _
          $region66: #{custom-call.10} parent=57 // pred_fallthru
            _
        $region58: #{custom-call.10} parent=53 // pred_fallthru
          _
        %428 = vnop
      $region54: #{custom-call.10} parent=5 // pred_fallthru
        _
      %p429 = scmp.le.s32.totalorder 2, %s3
      // Predicated region
      $region89: #{custom-call.10} parent=5 // pred_check
        %p430 = pneg %p429
      $region90: #{custom-call.10} parent=5 // pred_check_branch
        %432 = sbr.rel (%p430) target = $region92
      $region91: #{custom-call.10} parent=5 // pred_region
        %s433 = ssub.s32 %s3, 2
        %s434 = sand.u32 %s9, 1
        %s435 = sand.u32 %s9, 1
        %s436 = smul.addr %s435, 16
        %s437 = scalar_lea.vmem [#allocation1], %s436
      $region92: #{custom-call.10} parent=5 // pred_fallthru
        _
    $region6: #{custom-call.10} parent=1 // loop_footer
      %s7 = sadd.s32 1, %s3
    $region7: #{custom-call.10} parent=1 // loop_footer_branch
      %2 = sbr.rel target = $region3
    $region8: #{custom-call.10} parent=1 // loop_exit
      _

// kernel: custom-call.9
$region0: #{custom-call.9}
  %s0 = inlined_call_operand.vmem [shape: f32[3,18,10,1,16,16], index: 0, kind: input, shape index: {}]
  %s1 = inlined_call_operand.vmem [shape: f32[3,18,10,1,16,16], index: 1, kind: output, shape index: {}]
  $region1: #{custom-call.9} parent=0
    #allocation0 [shape = 'u8[16384]{0}', space=vmem, size = 0x4000, scoped, tag = 'operand span for operand 0']
    #allocation1 [shape = 'u8[16384]{0}', space=vmem, size = 0x4000, scoped, tag = 'operand span for operand 1']
    loop: start=0, step=1, limit=542
    $region2: #{custom-call.9} parent=1 // loop_pre_header
      _
    $region3: #{custom-call.9} parent=1 // loop_header
      %s3 = sphi 0, %s7
      %p4 = scmp.ge.s32.totalorder %s3, 542
      %s10 = sphi 0, %s50
      %s11 = sphi 0, %s46
      %s12 = sphi 0, %s42
      %s13 = sphi 0, %s38
      %s14 = sphi 0, %s34
      %s15 = sphi 0, %s30
      %s16 = sphi 0, %s10
      %s17 = sphi 0, %s11
      %s18 = sphi 0, %s12
      %s19 = sphi 0, %s13
      %s20 = sphi 0, %s14
      %s21 = sphi 0, %s15
      %s22 = sphi 0, %s16
      %s23 = sphi 0, %s17
      %s24 = sphi 0, %s18
      %s25 = sphi 0, %s19
      %s26 = sphi 0, %s20
      %s27 = sphi 0, %s21
    $region4: #{custom-call.9} parent=1 // loop_header_branch
      %6 = sbr.rel (%p4) target = $region8
    $region5: #{custom-call.9} parent=1 // loop_body
      %s8 = ssub.s32 %s3, 1
      %s9 = ssub.s32 %s3, 2
      %s28 = sadd.s32 1, %s15
      %p29 = scmp.ge.s32.totalorder %s28, 1
      %s30 = scalar_select %p29, 0, %s28
      %s31 = sadd.s32 1, %s14
      %s32 = scalar_select %p29, %s31, %s14
      %p33 = scmp.ge.s32.totalorder %s32, 1
      %s34 = scalar_select %p33, 0, %s32
      %s35 = sadd.s32 1, %s13
      %s36 = scalar_select %p33, %s35, %s13
      %p37 = scmp.ge.s32.totalorder %s36, 1
      %s38 = scalar_select %p37, 0, %s36
      %s39 = sadd.s32 1, %s12
      %s40 = scalar_select %p37, %s39, %s12
      %p41 = scmp.ge.s32.totalorder %s40, 10
      %s42 = scalar_select %p41, 0, %s40
      %s43 = sadd.s32 1, %s11
      %s44 = scalar_select %p41, %s43, %s11
      %p45 = scmp.ge.s32.totalorder %s44, 18
      %s46 = scalar_select %p45, 0, %s44
      %s47 = sadd.s32 1, %s10
      %s48 = scalar_select %p45, %s47, %s10
      %p49 = scmp.ge.s32.totalorder %s48, 3
      %s50 = scalar_select %p49, 0, %s48
      %p51 = scmp.le.s32.totalorder 1, %s3
      %p52 = scmp.lt.s32.totalorder %s3, 541
      %p53 = pnand %p51, %p52
      %p54 = pneg %p53
      // Predicated region
      $region9: #{custom-call.9} parent=5 // pred_check
        _
      $region10: #{custom-call.9} parent=5 // pred_check_branch
        %56 = sbr.rel (%p53) target = $region12
      $region11: #{custom-call.9} parent=5 // pred_region
        %s57 = ssub.s32 %s3, 1
      $region12: #{custom-call.9} parent=5 // pred_fallthru
        _
      %p58 = scmp.lt.s32.totalorder %s3, 540
      // Predicated region
      $region13: #{custom-call.9} parent=5 // pred_check
        %p59 = pneg %p58
      $region14: #{custom-call.9} parent=5 // pred_check_branch
        %61 = sbr.rel (%p59) target = $region16
      $region15: #{custom-call.9} parent=5 // pred_region
        %s62 = sand.u32 %s3, 1
        %s63 = sand.u32 %s3, 1
        %s64 = smul.addr %s63, 16
        %s65 = scalar_lea.vmem [#allocation0], %s64
        %s66 = sadd.s32 %s15, %s14
        %s67 = smul.addr %s13, 2
        %s68 = sadd.s32 %s66, %s67
        %s69 = smul.addr %s12, 2
        %s70 = sadd.s32 %s68, %s69
        %s71 = smul.addr %s11, 20
        %s72 = sadd.s32 %s70, %s71
        %s73 = smul.addr %s10, 360
        %s74 = sadd.s32 %s72, %s73
        %s75 = smul.addr %s74, 8
        %s76 = scalar_lea.vmem %s0, %s75
        // Predicated region
        $region17: #{custom-call.9} parent=15 // pred_check
          _
        $region18: #{custom-call.9} parent=15 // pred_check_branch
          %78 = sbr.rel (0) target = $region20
        $region19: #{custom-call.9} parent=15 // pred_region
          // Predicated region
          $region21: #{custom-call.9} parent=19 // pred_check
            _
          $region22: #{custom-call.9} parent=19 // pred_check_branch
            %80 = sbr.rel (0) target = $region24
          $region23: #{custom-call.9} parent=19 // pred_region
            // Predicated region
            $region36: #{custom-call.9} parent=23 // pred_check
              _
            $region37: #{custom-call.9} parent=23 // pred_check_branch
              %98 = sbr.rel (0) target = $region39
            $region38: #{custom-call.9} parent=23 // pred_region
              loop: start=0, step=1, limit=1
              $region40: #{custom-call.9} parent=38 // loop_pre_header
                _
              $region41: #{custom-call.9} parent=38 // loop_header
                %s100 = sphi 0, %s104
                %p101 = scmp.ge.s32.totalorder %s100, 1
                %s105 = sphi %s76, %s76
                %s106 = sphi %s65, %s65
              $region42: #{custom-call.9} parent=38 // loop_header_branch
                %103 = sbr.rel (%p101) target = $region46
              $region43: #{custom-call.9} parent=38 // loop_body
                %v107 = vld [vmem:[%s105] sm:$0xff]
                %108 = vst [vmem:[%s106] sm:$0xff] %v107
                %v109 = vld [vmem:[%s105 + $0x8] sm:$0xff]
                %110 = vst [vmem:[%s106 + $0x8] sm:$0xff] %v109
              $region44: #{custom-call.9} parent=38 // loop_footer
                %s104 = sadd.s32 1, %s100
              $region45: #{custom-call.9} parent=38 // loop_footer_branch
                %99 = sbr.rel target = $region41
              $region46: #{custom-call.9} parent=38 // loop_exit
                _
            $region39: #{custom-call.9} parent=23 // pred_fallthru
              _
            // Predicated region
            $region47: #{custom-call.9} parent=23 // pred_check
              _
            $region48: #{custom-call.9} parent=23 // pred_check_branch
              %112 = sbr.rel target = $region50
            $region49: #{custom-call.9} parent=23 // pred_region
              _
            $region50: #{custom-call.9} parent=23 // pred_fallthru
              _
          $region24: #{custom-call.9} parent=19 // pred_fallthru
            _
          // Predicated region
          $region25: #{custom-call.9} parent=19 // pred_check
            _
          $region26: #{custom-call.9} parent=19 // pred_check_branch
            %82 = sbr.rel target = $region28
          $region27: #{custom-call.9} parent=19 // pred_region
            %s84 = ssub.s32 256, 1
            loop: start=0, step=1, limit=1
            $region29: #{custom-call.9} parent=27 // loop_pre_header
              _
            $region30: #{custom-call.9} parent=27 // loop_header
              %s86 = sphi 0, %s90
              %p87 = scmp.ge.s32.totalorder %s86, 1
              %s91 = sphi %s76, %s76
              %s92 = sphi %s65, %s65
            $region31: #{custom-call.9} parent=27 // loop_header_branch
              %89 = sbr.rel (%p87) target = $region35
            $region32: #{custom-call.9} parent=27 // loop_body
              %v93 = vld [vmem:[%s91] sm:%s84]
              %94 = vst [vmem:[%s92] sm:%s84] %v93
              %v95 = vld [vmem:[%s91 + $0x8] sm:%s84]
              %96 = vst [vmem:[%s92 + $0x8] sm:%s84] %v95
            $region33: #{custom-call.9} parent=27 // loop_footer
              %s90 = sadd.s32 1, %s86
            $region34: #{custom-call.9} parent=27 // loop_footer_branch
              %85 = sbr.rel target = $region30
            $region35: #{custom-call.9} parent=27 // loop_exit
              _
          $region28: #{custom-call.9} parent=19 // pred_fallthru
            _
        $region20: #{custom-call.9} parent=15 // pred_fallthru
          _
        %113 = vnop
      $region16: #{custom-call.9} parent=5 // pred_fallthru
        _
      %p114 = scmp.le.s32.totalorder 1, %s3
      %p115 = scmp.lt.s32.totalorder %s3, 541
      %p116 = pnand %p114, %p115
      %p117 = pneg %p116
      // Predicated region
      $region51: #{custom-call.9} parent=5 // pred_check
        _
      $region52: #{custom-call.9} parent=5 // pred_check_branch
        %119 = sbr.rel (%p116) target = $region54
      $region53: #{custom-call.9} parent=5 // pred_region
        #allocation2 [shape = 'f32[16,16]{1,0}', space=vmem, size = 0x2000, scoped, tag = 'rescaled input a']
        %s120 = ssub.s32 %s3, 1
        %s121 = sand.u32 %s8, 1
        %s122 = sand.u32 %s8, 1
        %s123 = smul.addr %s122, 16
        %s124 = scalar_lea.vmem [#allocation0], %s123
        %s125 = sand.u32 %s8, 1
        %s126 = sand.u32 %s8, 1
        %s127 = smul.addr %s126, 16
        %s128 = scalar_lea.vmem [#allocation0], %s127
        %s129 = sand.u32 %s8, 1
        %s130 = sand.u32 %s8, 1
        %s131 = smul.addr %s130, 16
        %s132 = scalar_lea.vmem [#allocation1], %s131
        %v133 = vlaneseq
        %v134 = vand.u32 %v133, 127
        %vm135 = vcmp.lt.s32.totalorder %v134, 16
        %v136 = vlaneseq
        %v137 = vshrl.u32 %v136, 7
        %vm139 = vcmp.eq.s32.totalorder %v137, %v134
        %v140 = vld [vmem:[%s124] sm:$0xff]
        %v141 = vsel %vm139, %v140, 0.0
        %142 = vadd.xlane.f32.xlu0 %v141
        %v143 = vpop.xlane.xlu0 %142
        %vm144 = vcmp.le.s32.totalorder %v137, %v134
        %vm145 = vmand %vm144, %vm135
        %v146 = vsel %vm145, %v140, 0.0
        %v147 = vrcp.pop %v143
        %v148 = vmul.f32 %v146, %v147
        %149 = vst [vmem:[#allocation2] sm:$0xff] %v148
        %s150 = scalar_lea.vmem %s124, 8 [#allocation0]
        %s151 = scalar_lea.vmem [#allocation2], 8
        %v152 = vlaneseq
        %v153 = vshrl.u32 %v152, 7
        %v154 = vadd.s32 %v153, 8
        %vm155 = vcmp.eq.s32.totalorder %v154, %v134
        %v156 = vld [vmem:[%s150] sm:$0xff]
        %v157 = vsel %vm155, %v156, 0.0
        %158 = vadd.xlane.f32.xlu0 %v157
        %v159 = vpop.xlane.xlu0 %158
        %vm160 = vcmp.le.s32.totalorder %v154, %v134
        %vm161 = vmand %vm160, %vm135
        %v162 = vsel %vm161, %v156, 0.0
        %v163 = vrcp.pop %v159
        %v164 = vmul.f32 %v162, %v163
        %165 = vst [vmem:[%s151] sm:$0xff] %v164
        %v166 = vlaneseq
        %v167 = vand.u32 %v166, 127
        %v168 = vlaneseq
        %v169 = vshrl.u32 %v168, 7
        %vm171 = vcmp.eq.s32.totalorder %v167, %v169
        %v172 = vsel %vm171, -1.0, 0.0
        %v173 = vlaneseq
        %v174 = vand.u32 %v173, 127
        %v175 = vlaneseq
        %v176 = vshrl.u32 %v175, 7
        %v177 = vadd.s32 %v176, 8
        %vm178 = vcmp.eq.s32.totalorder %v174, %v177
        %v179 = vlaneseq
        %v180 = vand.u32 %v179, 127
        %vm181 = vcmp.eq.s32.totalorder %v180, 15
        %v182 = vsel %vm181, 1.0, -1.0
        %v183 = vsel %vm178, %v182, 0.0
        %s184 = scalar_lea.vmem [#allocation2], 14
        %v185 = vld [vmem:[%s184] ss:$0 sm:$0xff]
        %v186 = vxor.u32 %v185, 2147483648
        %v187 = vlaneseq
        %v188 = vand.u32 %v187, 127
        %vm189 = vcmp.eq.s32.totalorder %v188, 14
        %v190 = vmul.f32 %v186, %v183
        %191 = vadd.xlane.f32.xlu0 %v190
        %v192 = vpop.xlane.xlu0 %191
        %v193 = vsel %vm189, %v192, %v183
        %s194 = scalar_lea.vmem [#allocation2], 13
        %v195 = vld [vmem:[%s194] ss:$0 sm:$0xff]
        %v196 = vxor.u32 %v195, 2147483648
        %v197 = vlaneseq
        %v198 = vand.u32 %v197, 127
        %vm199 = vcmp.eq.s32.totalorder %v198, 13
        %v200 = vmul.f32 %v196, %v193
        %201 = vadd.xlane.f32.xlu0 %v200
        %v202 = vpop.xlane.xlu0 %201
        %v203 = vsel %vm199, %v202, %v193
        %s204 = scalar_lea.vmem [#allocation2], 12
        %v205 = vld [vmem:[%s204] ss:$0 sm:$0xff]
        %v206 = vxor.u32 %v205, 2147483648
        %v207 = vlaneseq
        %v208 = vand.u32 %v207, 127
        %vm209 = vcmp.eq.s32.totalorder %v208, 12
        %v210 = vmul.f32 %v206, %v203
        %211 = vadd.xlane.f32.xlu0 %v210
        %v212 = vpop.xlane.xlu0 %211
        %v213 = vsel %vm209, %v212, %v203
        %s214 = scalar_lea.vmem [#allocation2], 11
        %v215 = vld [vmem:[%s214] ss:$0 sm:$0xff]
        %v216 = vxor.u32 %v215, 2147483648
        %v217 = vlaneseq
        %v218 = vand.u32 %v217, 127
        %vm219 = vcmp.eq.s32.totalorder %v218, 11
        %v220 = vmul.f32 %v216, %v213
        %221 = vadd.xlane.f32.xlu0 %v220
        %v222 = vpop.xlane.xlu0 %221
        %v223 = vsel %vm219, %v222, %v213
        %s224 = scalar_lea.vmem [#allocation2], 10
        %v225 = vld [vmem:[%s224] ss:$0 sm:$0xff]
        %v226 = vxor.u32 %v225, 2147483648
        %v227 = vlaneseq
        %v228 = vand.u32 %v227, 127
        %vm229 = vcmp.eq.s32.totalorder %v228, 10
        %v230 = vmul.f32 %v226, %v223
        %231 = vadd.xlane.f32.xlu0 %v230
        %v232 = vpop.xlane.xlu0 %231
        %v233 = vsel %vm229, %v232, %v223
        %s234 = scalar_lea.vmem [#allocation2], 9
        %v235 = vld [vmem:[%s234] ss:$0 sm:$0xff]
        %v236 = vxor.u32 %v235, 2147483648
        %v237 = vlaneseq
        %v238 = vand.u32 %v237, 127
        %vm239 = vcmp.eq.s32.totalorder %v238, 9
        %v240 = vmul.f32 %v236, %v233
        %241 = vadd.xlane.f32.xlu0 %v240
        %v242 = vpop.xlane.xlu0 %241
        %v243 = vsel %vm239, %v242, %v233
        %s244 = scalar_lea.vmem [#allocation2], 8
        %v245 = vld [vmem:[%s244] ss:$0 sm:$0xff]
        %v246 = vxor.u32 %v245, 2147483648
        %v247 = vlaneseq
        %v248 = vand.u32 %v247, 127
        %vm249 = vcmp.eq.s32.totalorder %v248, 8
        %v250 = vmul.f32 %v246, %v243
        %251 = vadd.xlane.f32.xlu0 %v250
        %v252 = vpop.xlane.xlu0 %251
        %v253 = vsel %vm249, %v252, %v243
        %s254 = scalar_lea.vmem [#allocation2], 7
        %v255 = vld [vmem:[%s254] ss:$0 sm:$0xff]
        %v256 = vxor.u32 %v255, 2147483648
        %v257 = vlaneseq
        %v258 = vand.u32 %v257, 127
        %vm259 = vcmp.eq.s32.totalorder %v258, 7
        %v260 = vmul.f32 %v256, %v172
        %261 = vadd.xlane.f32.xlu0 %v260
        %v262 = vpop.xlane.xlu0 %261
        %v263 = vsel %vm259, %v262, %v172
        %v264 = vmul.f32 %v256, %v253
        %265 = vadd.xlane.f32.xlu0 %v264
        %v266 = vpop.xlane.xlu0 %265
        %v267 = vsel %vm259, %v266, %v253
        %s268 = scalar_lea.vmem [#allocation2], 6
        %v269 = vld [vmem:[%s268] ss:$0 sm:$0xff]
        %v270 = vxor.u32 %v269, 2147483648
        %v271 = vlaneseq
        %v272 = vand.u32 %v271, 127
        %vm273 = vcmp.eq.s32.totalorder %v272, 6
        %v274 = vmul.f32 %v270, %v263
        %275 = vadd.xlane.f32.xlu0 %v274
        %v276 = vpop.xlane.xlu0 %275
        %v277 = vsel %vm273, %v276, %v263
        %v278 = vmul.f32 %v270, %v267
        %279 = vadd.xlane.f32.xlu0 %v278
        %v280 = vpop.xlane.xlu0 %279
        %v281 = vsel %vm273, %v280, %v267
        %s282 = scalar_lea.vmem [#allocation2], 5
        %v283 = vld [vmem:[%s282] ss:$0 sm:$0xff]
        %v284 = vxor.u32 %v283, 2147483648
        %v285 = vlaneseq
        %v286 = vand.u32 %v285, 127
        %vm287 = vcmp.eq.s32.totalorder %v286, 5
        %v288 = vmul.f32 %v284, %v277
        %289 = vadd.xlane.f32.xlu0 %v288
        %v290 = vpop.xlane.xlu0 %289
        %v291 = vsel %vm287, %v290, %v277
        %v292 = vmul.f32 %v284, %v281
        %293 = vadd.xlane.f32.xlu0 %v292
        %v294 = vpop.xlane.xlu0 %293
        %v295 = vsel %vm287, %v294, %v281
        %s296 = scalar_lea.vmem [#allocation2], 4
        %v297 = vld [vmem:[%s296] ss:$0 sm:$0xff]
        %v298 = vxor.u32 %v297, 2147483648
        %v299 = vlaneseq
        %v300 = vand.u32 %v299, 127
        %vm301 = vcmp.eq.s32.totalorder %v300, 4
        %v302 = vmul.f32 %v298, %v291
        %303 = vadd.xlane.f32.xlu0 %v302
        %v304 = vpop.xlane.xlu0 %303
        %v305 = vsel %vm301, %v304, %v291
        %v306 = vmul.f32 %v298, %v295
        %307 = vadd.xlane.f32.xlu0 %v306
        %v308 = vpop.xlane.xlu0 %307
        %v309 = vsel %vm301, %v308, %v295
        %s310 = scalar_lea.vmem [#allocation2], 3
        %v311 = vld [vmem:[%s310] ss:$0 sm:$0xff]
        %v312 = vxor.u32 %v311, 2147483648
        %v313 = vlaneseq
        %v314 = vand.u32 %v313, 127
        %vm315 = vcmp.eq.s32.totalorder %v314, 3
        %v316 = vmul.f32 %v312, %v305
        %317 = vadd.xlane.f32.xlu0 %v316
        %v318 = vpop.xlane.xlu0 %317
        %v319 = vsel %vm315, %v318, %v305
        %v320 = vmul.f32 %v312, %v309
        %321 = vadd.xlane.f32.xlu0 %v320
        %v322 = vpop.xlane.xlu0 %321
        %v323 = vsel %vm315, %v322, %v309
        %s324 = scalar_lea.vmem [#allocation2], 2
        %v325 = vld [vmem:[%s324] ss:$0 sm:$0xff]
        %v326 = vxor.u32 %v325, 2147483648
        %v327 = vlaneseq
        %v328 = vand.u32 %v327, 127
        %vm329 = vcmp.eq.s32.totalorder %v328, 2
        %v330 = vmul.f32 %v326, %v319
        %331 = vadd.xlane.f32.xlu0 %v330
        %v332 = vpop.xlane.xlu0 %331
        %v333 = vsel %vm329, %v332, %v319
        %v334 = vmul.f32 %v326, %v323
        %335 = vadd.xlane.f32.xlu0 %v334
        %v336 = vpop.xlane.xlu0 %335
        %v337 = vsel %vm329, %v336, %v323
        %s338 = scalar_lea.vmem [#allocation2], 1
        %v339 = vld [vmem:[%s338] ss:$0 sm:$0xff]
        %v340 = vxor.u32 %v339, 2147483648
        %v341 = vlaneseq
        %v342 = vand.u32 %v341, 127
        %vm343 = vcmp.eq.s32.totalorder %v342, 1
        %v344 = vmul.f32 %v340, %v333
        %345 = vadd.xlane.f32.xlu0 %v344
        %v346 = vpop.xlane.xlu0 %345
        %v347 = vsel %vm343, %v346, %v333
        %v348 = vmul.f32 %v340, %v337
        %349 = vadd.xlane.f32.xlu0 %v348
        %v350 = vpop.xlane.xlu0 %349
        %v351 = vsel %vm343, %v350, %v337
        %v352 = vld [vmem:[#allocation2] ss:$0 sm:$0xff]
        %v353 = vxor.u32 %v352, 2147483648
        %v354 = vlaneseq
        %v355 = vand.u32 %v354, 127
        %vm356 = vcmp.eq.s32.totalorder %v355, 0
        %v357 = vmul.f32 %v353, %v347
        %358 = vadd.xlane.f32.xlu0 %v357
        %v359 = vpop.xlane.xlu0 %358
        %v360 = vsel %vm356, %v359, %v347
        %v361 = vmul.f32 %v353, %v351
        %362 = vadd.xlane.f32.xlu0 %v361
        %v363 = vpop.xlane.xlu0 %362
        %v364 = vsel %vm356, %v363, %v351
        %v365 = vrcp.pop %v143
        %v366 = vmul.f32 %v360, %v365
        %vm367 = vweird.f32 %v143
        %v368 = vsel %vm367, %v360, %v366
        %369 = vst [vmem:[%s132] sm:$0xff] %v368
        %v370 = vrcp.pop %v159
        %v371 = vmul.f32 %v364, %v370
        %vm372 = vweird.f32 %v159
        %v373 = vsel %vm372, %v364, %v371
        %s374 = scalar_lea.vmem %s132, 8 [#allocation1]
        %375 = vst [vmem:[%s374] sm:$0xff] %v373
        %s376 = sand.u32 %s8, 1
        %s377 = sand.u32 %s8, 1
        %s378 = smul.addr %s377, 16
        %s379 = scalar_lea.vmem [#allocation1], %s378
        %s380 = sadd.s32 %s21, %s20
        %s381 = smul.addr %s19, 2
        %s382 = sadd.s32 %s380, %s381
        %s383 = smul.addr %s18, 2
        %s384 = sadd.s32 %s382, %s383
        %s385 = smul.addr %s17, 20
        %s386 = sadd.s32 %s384, %s385
        %s387 = smul.addr %s16, 360
        %s388 = sadd.s32 %s386, %s387
        %s389 = smul.addr %s388, 8
        %s390 = scalar_lea.vmem %s1, %s389
        // Predicated region
        $region55: #{custom-call.9} parent=53 // pred_check
          _
        $region56: #{custom-call.9} parent=53 // pred_check_branch
          %392 = sbr.rel (0) target = $region58
        $region57: #{custom-call.9} parent=53 // pred_region
          // Predicated region
          $region59: #{custom-call.9} parent=57 // pred_check
            _
          $region60: #{custom-call.9} parent=57 // pred_check_branch
            %394 = sbr.rel (0) target = $region62
          $region61: #{custom-call.9} parent=57 // pred_region
            // Predicated region
            $region74: #{custom-call.9} parent=61 // pred_check
              _
            $region75: #{custom-call.9} parent=61 // pred_check_branch
              %412 = sbr.rel (0) target = $region77
            $region76: #{custom-call.9} parent=61 // pred_region
              loop: start=0, step=1, limit=1
              $region78: #{custom-call.9} parent=76 // loop_pre_header
                _
              $region79: #{custom-call.9} parent=76 // loop_header
                %s414 = sphi 0, %s418
                %p415 = scmp.ge.s32.totalorder %s414, 1
                %s419 = sphi %s379, %s379
                %s420 = sphi %s390, %s390
              $region80: #{custom-call.9} parent=76 // loop_header_branch
                %417 = sbr.rel (%p415) target = $region84
              $region81: #{custom-call.9} parent=76 // loop_body
                %v421 = vld [vmem:[%s419] sm:$0xff]
                %422 = vst [vmem:[%s420] sm:$0xff] %v421
                %v423 = vld [vmem:[%s419 + $0x8] sm:$0xff]
                %424 = vst [vmem:[%s420 + $0x8] sm:$0xff] %v423
              $region82: #{custom-call.9} parent=76 // loop_footer
                %s418 = sadd.s32 1, %s414
              $region83: #{custom-call.9} parent=76 // loop_footer_branch
                %413 = sbr.rel target = $region79
              $region84: #{custom-call.9} parent=76 // loop_exit
                _
            $region77: #{custom-call.9} parent=61 // pred_fallthru
              _
            // Predicated region
            $region85: #{custom-call.9} parent=61 // pred_check
              _
            $region86: #{custom-call.9} parent=61 // pred_check_branch
              %426 = sbr.rel target = $region88
            $region87: #{custom-call.9} parent=61 // pred_region
              _
            $region88: #{custom-call.9} parent=61 // pred_fallthru
              _
          $region62: #{custom-call.9} parent=57 // pred_fallthru
            _
          // Predicated region
          $region63: #{custom-call.9} parent=57 // pred_check
            _
          $region64: #{custom-call.9} parent=57 // pred_check_branch
            %396 = sbr.rel target = $region66
          $region65: #{custom-call.9} parent=57 // pred_region
            %s398 = ssub.s32 256, 1
            loop: start=0, step=1, limit=1
            $region67: #{custom-call.9} parent=65 // loop_pre_header
              _
            $region68: #{custom-call.9} parent=65 // loop_header
              %s400 = sphi 0, %s404
              %p401 = scmp.ge.s32.totalorder %s400, 1
              %s405 = sphi %s379, %s379
              %s406 = sphi %s390, %s390
            $region69: #{custom-call.9} parent=65 // loop_header_branch
              %403 = sbr.rel (%p401) target = $region73
            $region70: #{custom-call.9} parent=65 // loop_body
              %v407 = vld [vmem:[%s405] sm:%s398]
              %408 = vst [vmem:[%s406] sm:%s398] %v407
              %v409 = vld [vmem:[%s405 + $0x8] sm:%s398]
              %410 = vst [vmem:[%s406 + $0x8] sm:%s398] %v409
            $region71: #{custom-call.9} parent=65 // loop_footer
              %s404 = sadd.s32 1, %s400
            $region72: #{custom-call.9} parent=65 // loop_footer_branch
              %399 = sbr.rel target = $region68
            $region73: #{custom-call.9} parent=65 // loop_exit
              _
          $region66: #{custom-call.9} parent=57 // pred_fallthru
            _
        $region58: #{custom-call.9} parent=53 // pred_fallthru
          _
        %427 = vnop
      $region54: #{custom-call.9} parent=5 // pred_fallthru
        _
      %p428 = scmp.le.s32.totalorder 2, %s3
      // Predicated region
      $region89: #{custom-call.9} parent=5 // pred_check
        %p429 = pneg %p428
      $region90: #{custom-call.9} parent=5 // pred_check_branch
        %431 = sbr.rel (%p429) target = $region92
      $region91: #{custom-call.9} parent=5 // pred_region
        %s432 = ssub.s32 %s3, 2
        %s433 = sand.u32 %s9, 1
        %s434 = sand.u32 %s9, 1
        %s435 = smul.addr %s434, 16
        %s436 = scalar_lea.vmem [#allocation1], %s435
      $region92: #{custom-call.9} parent=5 // pred_fallthru
        _
    $region6: #{custom-call.9} parent=1 // loop_footer
      %s7 = sadd.s32 1, %s3
    $region7: #{custom-call.9} parent=1 // loop_footer_branch
      %2 = sbr.rel target = $region3
    $region8: #{custom-call.9} parent=1 // loop_exit
      _

// kernel: li_res_conv_ortho_forward.3
$region0: #{li_res_conv_ortho_forward.3}
  #allocation0 [shape = 'u32[]', space=smem, size = 0x4, offset = 0x4, fixed_abs, tag = 'smem constant byte address 0x4 - core index']
  #allocation1 [shape = 'u32[144,128]{1,0:T(1,128)}', space=vmem, size = 0x12000, scoped, tag = 'internal scratch']
  %s0 = inlined_call_operand.vmem [shape: f32[8,8,256], index: 0, kind: input, shape index: {}]
  %s1 = inlined_call_operand.vmem [shape: f32[8,8,256], index: 1, kind: input, shape index: {}]
  %s2 = inlined_call_operand.vmem [shape: f32[2,8,256], index: 2, kind: input, shape index: {}]
  %s3 = inlined_call_operand.vmem [shape: f32[2,8,256], index: 3, kind: input, shape index: {}]
  %s4 = inlined_call_operand.vmem [shape: f32[2,8,256], index: 4, kind: output, shape index: {0}]
  %s5 = inlined_call_operand.vmem [shape: f32[2,8,256], index: 5, kind: output, shape index: {1}]
  %6 = xla_tuple %s4, %s5
  %s7 = sld [smem:[#allocation0]]
  $region34: #{li_res_conv_ortho_forward.3} parent=0
    _
  %s9 = ssub.s32 1, %s7
  %s10 = scalar_select 0, %s9, %s7
  // Predicated region
  $region2: #{li_res_conv_ortho_forward.3} parent=0 // pred_check
    _
  $region3: #{li_res_conv_ortho_forward.3} parent=0 // pred_check_branch
    %12 = sbr.rel (0) target = $region5
  $region4: #{li_res_conv_ortho_forward.3} parent=0 // pred_region
    _
  $region5: #{li_res_conv_ortho_forward.3} parent=0 // pred_fallthru
    _
  // Predicated region
  $region6: #{li_res_conv_ortho_forward.3} parent=0 // pred_check
    _
  $region7: #{li_res_conv_ortho_forward.3} parent=0 // pred_check_branch
    %14 = sbr.rel (0) target = $region9
  $region8: #{li_res_conv_ortho_forward.3} parent=0 // pred_region
    _
  $region9: #{li_res_conv_ortho_forward.3} parent=0 // pred_fallthru
    _
  // Predicated region
  $region10: #{li_res_conv_ortho_forward.3} parent=0 // pred_check
    _
  $region11: #{li_res_conv_ortho_forward.3} parent=0 // pred_check_branch
    %16 = sbr.rel (0) target = $region13
  $region12: #{li_res_conv_ortho_forward.3} parent=0 // pred_region
    _
  $region13: #{li_res_conv_ortho_forward.3} parent=0 // pred_fallthru
    _
  // Predicated region
  $region14: #{li_res_conv_ortho_forward.3} parent=0 // pred_check
    _
  $region15: #{li_res_conv_ortho_forward.3} parent=0 // pred_check_branch
    %18 = sbr.rel (0) target = $region17
  $region16: #{li_res_conv_ortho_forward.3} parent=0 // pred_region
    _
  $region17: #{li_res_conv_ortho_forward.3} parent=0 // pred_fallthru
    _
  %v19 = vld [vmem:[%s2] ss:$8 sm:$0x3]
  %s20 = scalar_lea.vmem %s2, 16
  %v21 = vld [vmem:[%s20] ss:$8 sm:$0x3]
  %v22 = vld [vmem:[%s3] ss:$8 sm:$0x3]
  %s23 = scalar_lea.vmem %s3, 16
  %v24 = vld [vmem:[%s23] ss:$8 sm:$0x3]
  %v25 = vld [vmem:[%s0] sm:$0xff]
  %v26 = vld [vmem:[%s0 + $0x8] sm:$0xff]
  %v27 = vld [vmem:[%s1] sm:$0xff]
  %v28 = vld [vmem:[%s1 + $0x8] sm:$0xff]
  %v29 = vadd.f32 %v25, %v27
  %v30 = vadd.f32 %v26, %v28
  %v31 = vadd.f32 %v19, %v22
  %v32 = vadd.f32 %v21, %v24
  %v33 = vsub.f32 %v22, %v19
  %v34 = vsub.f32 %v24, %v21
  %v37 = vlaneseq
  %v38 = vshrl.u32 %v37, 7
  %v39 = vsub.s32 0, %v38
  %v40 = vrot.slane %v19, %v39
  %v41 = vlaneseq
  %v42 = vshrl.u32 %v41, 7
  %v43 = vsub.s32 1, %v42
  %v44 = vrot.slane %v19, %v43
  %v45 = vlaneseq
  %v46 = vshrl.u32 %v45, 7
  %v47 = vsub.s32 0, %v46
  %v48 = vrot.slane %v21, %v47
  %v49 = vlaneseq
  %v50 = vshrl.u32 %v49, 7
  %v51 = vsub.s32 1, %v50
  %v52 = vrot.slane %v21, %v51
  %v57 = vmul.f32 %v40, %v29
  %v58 = vmul.f32 %v44, %v30
  %v59 = vmul.f32 %v48, %v29
  %v60 = vmul.f32 %v52, %v30
  %v63 = vlaneseq
  %v64 = vshrl.u32 %v63, 7
  %v65 = vsub.s32 0, %v64
  %v66 = vrot.slane %v31, %v65
  %v67 = vlaneseq
  %v68 = vshrl.u32 %v67, 7
  %v69 = vsub.s32 1, %v68
  %v70 = vrot.slane %v31, %v69
  %v71 = vlaneseq
  %v72 = vshrl.u32 %v71, 7
  %v73 = vsub.s32 0, %v72
  %v74 = vrot.slane %v32, %v73
  %v75 = vlaneseq
  %v76 = vshrl.u32 %v75, 7
  %v77 = vsub.s32 1, %v76
  %v78 = vrot.slane %v32, %v77
  %v83 = vmul.f32 %v66, %v27
  %v84 = vmul.f32 %v70, %v28
  %v85 = vmul.f32 %v74, %v27
  %v86 = vmul.f32 %v78, %v28
  %v87 = vsub.f32 %v57, %v83
  %v88 = vsub.f32 %v58, %v84
  %v89 = vsub.f32 %v59, %v85
  %v90 = vsub.f32 %v60, %v86
  %v91 = vadd.f32 %v87, 0.0
  %v92 = vadd.f32 %v88, 0.0
  %v93 = vadd.f32 %v89, 0.0
  %v94 = vadd.f32 %v90, 0.0
  %v97 = vlaneseq
  %v98 = vshrl.u32 %v97, 7
  %v99 = vsub.s32 0, %v98
  %v100 = vrot.slane %v33, %v99
  %v101 = vlaneseq
  %v102 = vshrl.u32 %v101, 7
  %v103 = vsub.s32 1, %v102
  %v104 = vrot.slane %v33, %v103
  %v105 = vlaneseq
  %v106 = vshrl.u32 %v105, 7
  %v107 = vsub.s32 0, %v106
  %v108 = vrot.slane %v34, %v107
  %v109 = vlaneseq
  %v110 = vshrl.u32 %v109, 7
  %v111 = vsub.s32 1, %v110
  %v112 = vrot.slane %v34, %v111
  %v117 = vmul.f32 %v100, %v25
  %v118 = vmul.f32 %v104, %v26
  %v119 = vmul.f32 %v108, %v25
  %v120 = vmul.f32 %v112, %v26
  %v121 = vadd.f32 %v57, %v117
  %v122 = vadd.f32 %v58, %v118
  %v123 = vadd.f32 %v59, %v119
  %v124 = vadd.f32 %v60, %v120
  %v125 = vadd.f32 %v121, 0.0
  %v126 = vadd.f32 %v122, 0.0
  %v127 = vadd.f32 %v123, 0.0
  %v128 = vadd.f32 %v124, 0.0
  %s129 = scalar_lea.vmem %s2, 1
  %v130 = vld [vmem:[%s129] ss:$8 sm:$0x3]
  %s131 = scalar_lea.vmem %s2, 17
  %v132 = vld [vmem:[%s131] ss:$8 sm:$0x3]
  %s133 = scalar_lea.vmem %s3, 1
  %v134 = vld [vmem:[%s133] ss:$8 sm:$0x3]
  %s135 = scalar_lea.vmem %s3, 17
  %v136 = vld [vmem:[%s135] ss:$8 sm:$0x3]
  %s137 = scalar_lea.vmem %s0, 16
  %v138 = vld [vmem:[%s137] sm:$0xff]
  %v139 = vld [vmem:[%s137 + $0x8] sm:$0xff]
  %s140 = scalar_lea.vmem %s1, 16
  %v141 = vld [vmem:[%s140] sm:$0xff]
  %v142 = vld [vmem:[%s140 + $0x8] sm:$0xff]
  %v143 = vadd.f32 %v138, %v141
  %v144 = vadd.f32 %v139, %v142
  %v145 = vadd.f32 %v130, %v134
  %v146 = vadd.f32 %v132, %v136
  %v147 = vsub.f32 %v134, %v130
  %v148 = vsub.f32 %v136, %v132
  %v151 = vlaneseq
  %v152 = vshrl.u32 %v151, 7
  %v153 = vsub.s32 0, %v152
  %v154 = vrot.slane %v130, %v153
  %v155 = vlaneseq
  %v156 = vshrl.u32 %v155, 7
  %v157 = vsub.s32 1, %v156
  %v158 = vrot.slane %v130, %v157
  %v159 = vlaneseq
  %v160 = vshrl.u32 %v159, 7
  %v161 = vsub.s32 0, %v160
  %v162 = vrot.slane %v132, %v161
  %v163 = vlaneseq
  %v164 = vshrl.u32 %v163, 7
  %v165 = vsub.s32 1, %v164
  %v166 = vrot.slane %v132, %v165
  %v171 = vmul.f32 %v154, %v143
  %v172 = vmul.f32 %v158, %v144
  %v173 = vmul.f32 %v162, %v143
  %v174 = vmul.f32 %v166, %v144
  %v177 = vlaneseq
  %v178 = vshrl.u32 %v177, 7
  %v179 = vsub.s32 0, %v178
  %v180 = vrot.slane %v145, %v179
  %v181 = vlaneseq
  %v182 = vshrl.u32 %v181, 7
  %v183 = vsub.s32 1, %v182
  %v184 = vrot.slane %v145, %v183
  %v185 = vlaneseq
  %v186 = vshrl.u32 %v185, 7
  %v187 = vsub.s32 0, %v186
  %v188 = vrot.slane %v146, %v187
  %v189 = vlaneseq
  %v190 = vshrl.u32 %v189, 7
  %v191 = vsub.s32 1, %v190
  %v192 = vrot.slane %v146, %v191
  %v197 = vmul.f32 %v180, %v141
  %v198 = vmul.f32 %v184, %v142
  %v199 = vmul.f32 %v188, %v141
  %v200 = vmul.f32 %v192, %v142
  %v201 = vsub.f32 %v171, %v197
  %v202 = vsub.f32 %v172, %v198
  %v203 = vsub.f32 %v173, %v199
  %v204 = vsub.f32 %v174, %v200
  %v205 = vadd.f32 %v91, %v201
  %v206 = vadd.f32 %v92, %v202
  %v207 = vadd.f32 %v93, %v203
  %v208 = vadd.f32 %v94, %v204
  %v211 = vlaneseq
  %v212 = vshrl.u32 %v211, 7
  %v213 = vsub.s32 0, %v212
  %v214 = vrot.slane %v147, %v213
  %v215 = vlaneseq
  %v216 = vshrl.u32 %v215, 7
  %v217 = vsub.s32 1, %v216
  %v218 = vrot.slane %v147, %v217
  %v219 = vlaneseq
  %v220 = vshrl.u32 %v219, 7
  %v221 = vsub.s32 0, %v220
  %v222 = vrot.slane %v148, %v221
  %v223 = vlaneseq
  %v224 = vshrl.u32 %v223, 7
  %v225 = vsub.s32 1, %v224
  %v226 = vrot.slane %v148, %v225
  %v231 = vmul.f32 %v214, %v138
  %v232 = vmul.f32 %v218, %v139
  %v233 = vmul.f32 %v222, %v138
  %v234 = vmul.f32 %v226, %v139
  %v235 = vadd.f32 %v171, %v231
  %v236 = vadd.f32 %v172, %v232
  %v237 = vadd.f32 %v173, %v233
  %v238 = vadd.f32 %v174, %v234
  %v239 = vadd.f32 %v125, %v235
  %v240 = vadd.f32 %v126, %v236
  %v241 = vadd.f32 %v127, %v237
  %v242 = vadd.f32 %v128, %v238
  %s243 = scalar_lea.vmem %s2, 2
  %v244 = vld [vmem:[%s243] ss:$8 sm:$0x3]
  %s245 = scalar_lea.vmem %s2, 18
  %v246 = vld [vmem:[%s245] ss:$8 sm:$0x3]
  %s247 = scalar_lea.vmem %s3, 2
  %v248 = vld [vmem:[%s247] ss:$8 sm:$0x3]
  %s249 = scalar_lea.vmem %s3, 18
  %v250 = vld [vmem:[%s249] ss:$8 sm:$0x3]
  %s251 = scalar_lea.vmem %s0, 32
  %v252 = vld [vmem:[%s251] sm:$0xff]
  %v253 = vld [vmem:[%s251 + $0x8] sm:$0xff]
  %s254 = scalar_lea.vmem %s1, 32
  %v255 = vld [vmem:[%s254] sm:$0xff]
  %v256 = vld [vmem:[%s254 + $0x8] sm:$0xff]
  %v257 = vadd.f32 %v252, %v255
  %v258 = vadd.f32 %v253, %v256
  %v259 = vadd.f32 %v244, %v248
  %v260 = vadd.f32 %v246, %v250
  %v261 = vsub.f32 %v248, %v244
  %v262 = vsub.f32 %v250, %v246
  %v265 = vlaneseq
  %v266 = vshrl.u32 %v265, 7
  %v267 = vsub.s32 0, %v266
  %v268 = vrot.slane %v244, %v267
  %v269 = vlaneseq
  %v270 = vshrl.u32 %v269, 7
  %v271 = vsub.s32 1, %v270
  %v272 = vrot.slane %v244, %v271
  %v273 = vlaneseq
  %v274 = vshrl.u32 %v273, 7
  %v275 = vsub.s32 0, %v274
  %v276 = vrot.slane %v246, %v275
  %v277 = vlaneseq
  %v278 = vshrl.u32 %v277, 7
  %v279 = vsub.s32 1, %v278
  %v280 = vrot.slane %v246, %v279
  %v285 = vmul.f32 %v268, %v257
  %v286 = vmul.f32 %v272, %v258
  %v287 = vmul.f32 %v276, %v257
  %v288 = vmul.f32 %v280, %v258
  %v291 = vlaneseq
  %v292 = vshrl.u32 %v291, 7
  %v293 = vsub.s32 0, %v292
  %v294 = vrot.slane %v259, %v293
  %v295 = vlaneseq
  %v296 = vshrl.u32 %v295, 7
  %v297 = vsub.s32 1, %v296
  %v298 = vrot.slane %v259, %v297
  %v299 = vlaneseq
  %v300 = vshrl.u32 %v299, 7
  %v301 = vsub.s32 0, %v300
  %v302 = vrot.slane %v260, %v301
  %v303 = vlaneseq
  %v304 = vshrl.u32 %v303, 7
  %v305 = vsub.s32 1, %v304
  %v306 = vrot.slane %v260, %v305
  %v311 = vmul.f32 %v294, %v255
  %v312 = vmul.f32 %v298, %v256
  %v313 = vmul.f32 %v302, %v255
  %v314 = vmul.f32 %v306, %v256
  %v315 = vsub.f32 %v285, %v311
  %v316 = vsub.f32 %v286, %v312
  %v317 = vsub.f32 %v287, %v313
  %v318 = vsub.f32 %v288, %v314
  %v319 = vadd.f32 %v205, %v315
  %v320 = vadd.f32 %v206, %v316
  %v321 = vadd.f32 %v207, %v317
  %v322 = vadd.f32 %v208, %v318
  %v325 = vlaneseq
  %v326 = vshrl.u32 %v325, 7
  %v327 = vsub.s32 0, %v326
  %v328 = vrot.slane %v261, %v327
  %v329 = vlaneseq
  %v330 = vshrl.u32 %v329, 7
  %v331 = vsub.s32 1, %v330
  %v332 = vrot.slane %v261, %v331
  %v333 = vlaneseq
  %v334 = vshrl.u32 %v333, 7
  %v335 = vsub.s32 0, %v334
  %v336 = vrot.slane %v262, %v335
  %v337 = vlaneseq
  %v338 = vshrl.u32 %v337, 7
  %v339 = vsub.s32 1, %v338
  %v340 = vrot.slane %v262, %v339
  %v345 = vmul.f32 %v328, %v252
  %v346 = vmul.f32 %v332, %v253
  %v347 = vmul.f32 %v336, %v252
  %v348 = vmul.f32 %v340, %v253
  %v349 = vadd.f32 %v285, %v345
  %v350 = vadd.f32 %v286, %v346
  %v351 = vadd.f32 %v287, %v347
  %v352 = vadd.f32 %v288, %v348
  %v353 = vadd.f32 %v239, %v349
  %v354 = vadd.f32 %v240, %v350
  %v355 = vadd.f32 %v241, %v351
  %v356 = vadd.f32 %v242, %v352
  %s357 = scalar_lea.vmem %s2, 3
  %v358 = vld [vmem:[%s357] ss:$8 sm:$0x3]
  %s359 = scalar_lea.vmem %s2, 19
  %v360 = vld [vmem:[%s359] ss:$8 sm:$0x3]
  %s361 = scalar_lea.vmem %s3, 3
  %v362 = vld [vmem:[%s361] ss:$8 sm:$0x3]
  %s363 = scalar_lea.vmem %s3, 19
  %v364 = vld [vmem:[%s363] ss:$8 sm:$0x3]
  %s365 = scalar_lea.vmem %s0, 48
  %v366 = vld [vmem:[%s365] sm:$0xff]
  %v367 = vld [vmem:[%s365 + $0x8] sm:$0xff]
  %s368 = scalar_lea.vmem %s1, 48
  %v369 = vld [vmem:[%s368] sm:$0xff]
  %v370 = vld [vmem:[%s368 + $0x8] sm:$0xff]
  %v371 = vadd.f32 %v366, %v369
  %v372 = vadd.f32 %v367, %v370
  %v373 = vadd.f32 %v358, %v362
  %v374 = vadd.f32 %v360, %v364
  %v375 = vsub.f32 %v362, %v358
  %v376 = vsub.f32 %v364, %v360
  %v379 = vlaneseq
  %v380 = vshrl.u32 %v379, 7
  %v381 = vsub.s32 0, %v380
  %v382 = vrot.slane %v358, %v381
  %v383 = vlaneseq
  %v384 = vshrl.u32 %v383, 7
  %v385 = vsub.s32 1, %v384
  %v386 = vrot.slane %v358, %v385
  %v387 = vlaneseq
  %v388 = vshrl.u32 %v387, 7
  %v389 = vsub.s32 0, %v388
  %v390 = vrot.slane %v360, %v389
  %v391 = vlaneseq
  %v392 = vshrl.u32 %v391, 7
  %v393 = vsub.s32 1, %v392
  %v394 = vrot.slane %v360, %v393
  %v399 = vmul.f32 %v382, %v371
  %v400 = vmul.f32 %v386, %v372
  %v401 = vmul.f32 %v390, %v371
  %v402 = vmul.f32 %v394, %v372
  %v405 = vlaneseq
  %v406 = vshrl.u32 %v405, 7
  %v407 = vsub.s32 0, %v406
  %v408 = vrot.slane %v373, %v407
  %v409 = vlaneseq
  %v410 = vshrl.u32 %v409, 7
  %v411 = vsub.s32 1, %v410
  %v412 = vrot.slane %v373, %v411
  %v413 = vlaneseq
  %v414 = vshrl.u32 %v413, 7
  %v415 = vsub.s32 0, %v414
  %v416 = vrot.slane %v374, %v415
  %v417 = vlaneseq
  %v418 = vshrl.u32 %v417, 7
  %v419 = vsub.s32 1, %v418
  %v420 = vrot.slane %v374, %v419
  %v425 = vmul.f32 %v408, %v369
  %v426 = vmul.f32 %v412, %v370
  %v427 = vmul.f32 %v416, %v369
  %v428 = vmul.f32 %v420, %v370
  %v429 = vsub.f32 %v399, %v425
  %v430 = vsub.f32 %v400, %v426
  %v431 = vsub.f32 %v401, %v427
  %v432 = vsub.f32 %v402, %v428
  %v433 = vadd.f32 %v319, %v429
  %v434 = vadd.f32 %v320, %v430
  %v435 = vadd.f32 %v321, %v431
  %v436 = vadd.f32 %v322, %v432
  %v439 = vlaneseq
  %v440 = vshrl.u32 %v439, 7
  %v441 = vsub.s32 0, %v440
  %v442 = vrot.slane %v375, %v441
  %v443 = vlaneseq
  %v444 = vshrl.u32 %v443, 7
  %v445 = vsub.s32 1, %v444
  %v446 = vrot.slane %v375, %v445
  %v447 = vlaneseq
  %v448 = vshrl.u32 %v447, 7
  %v449 = vsub.s32 0, %v448
  %v450 = vrot.slane %v376, %v449
  %v451 = vlaneseq
  %v452 = vshrl.u32 %v451, 7
  %v453 = vsub.s32 1, %v452
  %v454 = vrot.slane %v376, %v453
  %v459 = vmul.f32 %v442, %v366
  %v460 = vmul.f32 %v446, %v367
  %v461 = vmul.f32 %v450, %v366
  %v462 = vmul.f32 %v454, %v367
  %v463 = vadd.f32 %v399, %v459
  %v464 = vadd.f32 %v400, %v460
  %v465 = vadd.f32 %v401, %v461
  %v466 = vadd.f32 %v402, %v462
  %v467 = vadd.f32 %v353, %v463
  %v468 = vadd.f32 %v354, %v464
  %v469 = vadd.f32 %v355, %v465
  %v470 = vadd.f32 %v356, %v466
  %s471 = scalar_lea.vmem %s2, 4
  %v472 = vld [vmem:[%s471] ss:$8 sm:$0x3]
  %s473 = scalar_lea.vmem %s2, 20
  %v474 = vld [vmem:[%s473] ss:$8 sm:$0x3]
  %s475 = scalar_lea.vmem %s3, 4
  %v476 = vld [vmem:[%s475] ss:$8 sm:$0x3]
  %s477 = scalar_lea.vmem %s3, 20
  %v478 = vld [vmem:[%s477] ss:$8 sm:$0x3]
  %s479 = scalar_lea.vmem %s0, 64
  %v480 = vld [vmem:[%s479] sm:$0xff]
  %v481 = vld [vmem:[%s479 + $0x8] sm:$0xff]
  %s482 = scalar_lea.vmem %s1, 64
  %v483 = vld [vmem:[%s482] sm:$0xff]
  %v484 = vld [vmem:[%s482 + $0x8] sm:$0xff]
  %v485 = vadd.f32 %v480, %v483
  %v486 = vadd.f32 %v481, %v484
  %v487 = vadd.f32 %v472, %v476
  %v488 = vadd.f32 %v474, %v478
  %v489 = vsub.f32 %v476, %v472
  %v490 = vsub.f32 %v478, %v474
  %v493 = vlaneseq
  %v494 = vshrl.u32 %v493, 7
  %v495 = vsub.s32 0, %v494
  %v496 = vrot.slane %v472, %v495
  %v497 = vlaneseq
  %v498 = vshrl.u32 %v497, 7
  %v499 = vsub.s32 1, %v498
  %v500 = vrot.slane %v472, %v499
  %v501 = vlaneseq
  %v502 = vshrl.u32 %v501, 7
  %v503 = vsub.s32 0, %v502
  %v504 = vrot.slane %v474, %v503
  %v505 = vlaneseq
  %v506 = vshrl.u32 %v505, 7
  %v507 = vsub.s32 1, %v506
  %v508 = vrot.slane %v474, %v507
  %v513 = vmul.f32 %v496, %v485
  %v514 = vmul.f32 %v500, %v486
  %v515 = vmul.f32 %v504, %v485
  %v516 = vmul.f32 %v508, %v486
  %v519 = vlaneseq
  %v520 = vshrl.u32 %v519, 7
  %v521 = vsub.s32 0, %v520
  %v522 = vrot.slane %v487, %v521
  %v523 = vlaneseq
  %v524 = vshrl.u32 %v523, 7
  %v525 = vsub.s32 1, %v524
  %v526 = vrot.slane %v487, %v525
  %v527 = vlaneseq
  %v528 = vshrl.u32 %v527, 7
  %v529 = vsub.s32 0, %v528
  %v530 = vrot.slane %v488, %v529
  %v531 = vlaneseq
  %v532 = vshrl.u32 %v531, 7
  %v533 = vsub.s32 1, %v532
  %v534 = vrot.slane %v488, %v533
  %v539 = vmul.f32 %v522, %v483
  %v540 = vmul.f32 %v526, %v484
  %v541 = vmul.f32 %v530, %v483
  %v542 = vmul.f32 %v534, %v484
  %v543 = vsub.f32 %v513, %v539
  %v544 = vsub.f32 %v514, %v540
  %v545 = vsub.f32 %v515, %v541
  %v546 = vsub.f32 %v516, %v542
  %v547 = vadd.f32 %v433, %v543
  %v548 = vadd.f32 %v434, %v544
  %v549 = vadd.f32 %v435, %v545
  %v550 = vadd.f32 %v436, %v546
  %v553 = vlaneseq
  %v554 = vshrl.u32 %v553, 7
  %v555 = vsub.s32 0, %v554
  %v556 = vrot.slane %v489, %v555
  %v557 = vlaneseq
  %v558 = vshrl.u32 %v557, 7
  %v559 = vsub.s32 1, %v558
  %v560 = vrot.slane %v489, %v559
  %v561 = vlaneseq
  %v562 = vshrl.u32 %v561, 7
  %v563 = vsub.s32 0, %v562
  %v564 = vrot.slane %v490, %v563
  %v565 = vlaneseq
  %v566 = vshrl.u32 %v565, 7
  %v567 = vsub.s32 1, %v566
  %v568 = vrot.slane %v490, %v567
  %v573 = vmul.f32 %v556, %v480
  %v574 = vmul.f32 %v560, %v481
  %v575 = vmul.f32 %v564, %v480
  %v576 = vmul.f32 %v568, %v481
  %v577 = vadd.f32 %v513, %v573
  %v578 = vadd.f32 %v514, %v574
  %v579 = vadd.f32 %v515, %v575
  %v580 = vadd.f32 %v516, %v576
  %v581 = vadd.f32 %v467, %v577
  %v582 = vadd.f32 %v468, %v578
  %v583 = vadd.f32 %v469, %v579
  %v584 = vadd.f32 %v470, %v580
  %s585 = scalar_lea.vmem %s2, 5
  %v586 = vld [vmem:[%s585] ss:$8 sm:$0x3]
  %s587 = scalar_lea.vmem %s2, 21
  %v588 = vld [vmem:[%s587] ss:$8 sm:$0x3]
  %s589 = scalar_lea.vmem %s3, 5
  %v590 = vld [vmem:[%s589] ss:$8 sm:$0x3]
  %s591 = scalar_lea.vmem %s3, 21
  %v592 = vld [vmem:[%s591] ss:$8 sm:$0x3]
  %s593 = scalar_lea.vmem %s0, 80
  %v594 = vld [vmem:[%s593] sm:$0xff]
  %v595 = vld [vmem:[%s593 + $0x8] sm:$0xff]
  %s596 = scalar_lea.vmem %s1, 80
  %v597 = vld [vmem:[%s596] sm:$0xff]
  %v598 = vld [vmem:[%s596 + $0x8] sm:$0xff]
  %v599 = vadd.f32 %v594, %v597
  %v600 = vadd.f32 %v595, %v598
  %v601 = vadd.f32 %v586, %v590
  %v602 = vadd.f32 %v588, %v592
  %v603 = vsub.f32 %v590, %v586
  %v604 = vsub.f32 %v592, %v588
  %v607 = vlaneseq
  %v608 = vshrl.u32 %v607, 7
  %v609 = vsub.s32 0, %v608
  %v610 = vrot.slane %v586, %v609
  %v611 = vlaneseq
  %v612 = vshrl.u32 %v611, 7
  %v613 = vsub.s32 1, %v612
  %v614 = vrot.slane %v586, %v613
  %v615 = vlaneseq
  %v616 = vshrl.u32 %v615, 7
  %v617 = vsub.s32 0, %v616
  %v618 = vrot.slane %v588, %v617
  %v619 = vlaneseq
  %v620 = vshrl.u32 %v619, 7
  %v621 = vsub.s32 1, %v620
  %v622 = vrot.slane %v588, %v621
  %v627 = vmul.f32 %v610, %v599
  %v628 = vmul.f32 %v614, %v600
  %v629 = vmul.f32 %v618, %v599
  %v630 = vmul.f32 %v622, %v600
  %v633 = vlaneseq
  %v634 = vshrl.u32 %v633, 7
  %v635 = vsub.s32 0, %v634
  %v636 = vrot.slane %v601, %v635
  %v637 = vlaneseq
  %v638 = vshrl.u32 %v637, 7
  %v639 = vsub.s32 1, %v638
  %v640 = vrot.slane %v601, %v639
  %v641 = vlaneseq
  %v642 = vshrl.u32 %v641, 7
  %v643 = vsub.s32 0, %v642
  %v644 = vrot.slane %v602, %v643
  %v645 = vlaneseq
  %v646 = vshrl.u32 %v645, 7
  %v647 = vsub.s32 1, %v646
  %v648 = vrot.slane %v602, %v647
  %v653 = vmul.f32 %v636, %v597
  %v654 = vmul.f32 %v640, %v598
  %v655 = vmul.f32 %v644, %v597
  %v656 = vmul.f32 %v648, %v598
  %v657 = vsub.f32 %v627, %v653
  %v658 = vsub.f32 %v628, %v654
  %v659 = vsub.f32 %v629, %v655
  %v660 = vsub.f32 %v630, %v656
  %v661 = vadd.f32 %v547, %v657
  %v662 = vadd.f32 %v548, %v658
  %v663 = vadd.f32 %v549, %v659
  %v664 = vadd.f32 %v550, %v660
  %v667 = vlaneseq
  %v668 = vshrl.u32 %v667, 7
  %v669 = vsub.s32 0, %v668
  %v670 = vrot.slane %v603, %v669
  %v671 = vlaneseq
  %v672 = vshrl.u32 %v671, 7
  %v673 = vsub.s32 1, %v672
  %v674 = vrot.slane %v603, %v673
  %v675 = vlaneseq
  %v676 = vshrl.u32 %v675, 7
  %v677 = vsub.s32 0, %v676
  %v678 = vrot.slane %v604, %v677
  %v679 = vlaneseq
  %v680 = vshrl.u32 %v679, 7
  %v681 = vsub.s32 1, %v680
  %v682 = vrot.slane %v604, %v681
  %v687 = vmul.f32 %v670, %v594
  %v688 = vmul.f32 %v674, %v595
  %v689 = vmul.f32 %v678, %v594
  %v690 = vmul.f32 %v682, %v595
  %v691 = vadd.f32 %v627, %v687
  %v692 = vadd.f32 %v628, %v688
  %v693 = vadd.f32 %v629, %v689
  %v694 = vadd.f32 %v630, %v690
  %v695 = vadd.f32 %v581, %v691
  %v696 = vadd.f32 %v582, %v692
  %v697 = vadd.f32 %v583, %v693
  %v698 = vadd.f32 %v584, %v694
  %s699 = scalar_lea.vmem %s2, 6
  %v700 = vld [vmem:[%s699] ss:$8 sm:$0x3]
  %s701 = scalar_lea.vmem %s2, 22
  %v702 = vld [vmem:[%s701] ss:$8 sm:$0x3]
  %s703 = scalar_lea.vmem %s3, 6
  %v704 = vld [vmem:[%s703] ss:$8 sm:$0x3]
  %s705 = scalar_lea.vmem %s3, 22
  %v706 = vld [vmem:[%s705] ss:$8 sm:$0x3]
  %s707 = scalar_lea.vmem %s0, 96
  %v708 = vld [vmem:[%s707] sm:$0xff]
  %v709 = vld [vmem:[%s707 + $0x8] sm:$0xff]
  %s710 = scalar_lea.vmem %s1, 96
  %v711 = vld [vmem:[%s710] sm:$0xff]
  %v712 = vld [vmem:[%s710 + $0x8] sm:$0xff]
  %v713 = vadd.f32 %v708, %v711
  %v714 = vadd.f32 %v709, %v712
  %v715 = vadd.f32 %v700, %v704
  %v716 = vadd.f32 %v702, %v706
  %v717 = vsub.f32 %v704, %v700
  %v718 = vsub.f32 %v706, %v702
  %v721 = vlaneseq
  %v722 = vshrl.u32 %v721, 7
  %v723 = vsub.s32 0, %v722
  %v724 = vrot.slane %v700, %v723
  %v725 = vlaneseq
  %v726 = vshrl.u32 %v725, 7
  %v727 = vsub.s32 1, %v726
  %v728 = vrot.slane %v700, %v727
  %v729 = vlaneseq
  %v730 = vshrl.u32 %v729, 7
  %v731 = vsub.s32 0, %v730
  %v732 = vrot.slane %v702, %v731
  %v733 = vlaneseq
  %v734 = vshrl.u32 %v733, 7
  %v735 = vsub.s32 1, %v734
  %v736 = vrot.slane %v702, %v735
  %v741 = vmul.f32 %v724, %v713
  %v742 = vmul.f32 %v728, %v714
  %v743 = vmul.f32 %v732, %v713
  %v744 = vmul.f32 %v736, %v714
  %v747 = vlaneseq
  %v748 = vshrl.u32 %v747, 7
  %v749 = vsub.s32 0, %v748
  %v750 = vrot.slane %v715, %v749
  %v751 = vlaneseq
  %v752 = vshrl.u32 %v751, 7
  %v753 = vsub.s32 1, %v752
  %v754 = vrot.slane %v715, %v753
  %v755 = vlaneseq
  %v756 = vshrl.u32 %v755, 7
  %v757 = vsub.s32 0, %v756
  %v758 = vrot.slane %v716, %v757
  %v759 = vlaneseq
  %v760 = vshrl.u32 %v759, 7
  %v761 = vsub.s32 1, %v760
  %v762 = vrot.slane %v716, %v761
  %v767 = vmul.f32 %v750, %v711
  %v768 = vmul.f32 %v754, %v712
  %v769 = vmul.f32 %v758, %v711
  %v770 = vmul.f32 %v762, %v712
  %v771 = vsub.f32 %v741, %v767
  %v772 = vsub.f32 %v742, %v768
  %v773 = vsub.f32 %v743, %v769
  %v774 = vsub.f32 %v744, %v770
  %v775 = vadd.f32 %v661, %v771
  %v776 = vadd.f32 %v662, %v772
  %v777 = vadd.f32 %v663, %v773
  %v778 = vadd.f32 %v664, %v774
  %v781 = vlaneseq
  %v782 = vshrl.u32 %v781, 7
  %v783 = vsub.s32 0, %v782
  %v784 = vrot.slane %v717, %v783
  %v785 = vlaneseq
  %v786 = vshrl.u32 %v785, 7
  %v787 = vsub.s32 1, %v786
  %v788 = vrot.slane %v717, %v787
  %v789 = vlaneseq
  %v790 = vshrl.u32 %v789, 7
  %v791 = vsub.s32 0, %v790
  %v792 = vrot.slane %v718, %v791
  %v793 = vlaneseq
  %v794 = vshrl.u32 %v793, 7
  %v795 = vsub.s32 1, %v794
  %v796 = vrot.slane %v718, %v795
  %v801 = vmul.f32 %v784, %v708
  %v802 = vmul.f32 %v788, %v709
  %v803 = vmul.f32 %v792, %v708
  %v804 = vmul.f32 %v796, %v709
  %v805 = vadd.f32 %v741, %v801
  %v806 = vadd.f32 %v742, %v802
  %v807 = vadd.f32 %v743, %v803
  %v808 = vadd.f32 %v744, %v804
  %v809 = vadd.f32 %v695, %v805
  %v810 = vadd.f32 %v696, %v806
  %v811 = vadd.f32 %v697, %v807
  %v812 = vadd.f32 %v698, %v808
  %s813 = scalar_lea.vmem %s2, 7
  %v814 = vld [vmem:[%s813] ss:$8 sm:$0x3]
  %s815 = scalar_lea.vmem %s2, 23
  %v816 = vld [vmem:[%s815] ss:$8 sm:$0x3]
  %s817 = scalar_lea.vmem %s3, 7
  %v818 = vld [vmem:[%s817] ss:$8 sm:$0x3]
  %s819 = scalar_lea.vmem %s3, 23
  %v820 = vld [vmem:[%s819] ss:$8 sm:$0x3]
  %s821 = scalar_lea.vmem %s0, 112
  %v822 = vld [vmem:[%s821] sm:$0xff]
  %v823 = vld [vmem:[%s821 + $0x8] sm:$0xff]
  %s824 = scalar_lea.vmem %s1, 112
  %v825 = vld [vmem:[%s824] sm:$0xff]
  %v826 = vld [vmem:[%s824 + $0x8] sm:$0xff]
  %v827 = vadd.f32 %v822, %v825
  %v828 = vadd.f32 %v823, %v826
  %v829 = vadd.f32 %v814, %v818
  %v830 = vadd.f32 %v816, %v820
  %v831 = vsub.f32 %v818, %v814
  %v832 = vsub.f32 %v820, %v816
  %v835 = vlaneseq
  %v836 = vshrl.u32 %v835, 7
  %v837 = vsub.s32 0, %v836
  %v838 = vrot.slane %v814, %v837
  %v839 = vlaneseq
  %v840 = vshrl.u32 %v839, 7
  %v841 = vsub.s32 1, %v840
  %v842 = vrot.slane %v814, %v841
  %v843 = vlaneseq
  %v844 = vshrl.u32 %v843, 7
  %v845 = vsub.s32 0, %v844
  %v846 = vrot.slane %v816, %v845
  %v847 = vlaneseq
  %v848 = vshrl.u32 %v847, 7
  %v849 = vsub.s32 1, %v848
  %v850 = vrot.slane %v816, %v849
  %v855 = vmul.f32 %v838, %v827
  %v856 = vmul.f32 %v842, %v828
  %v857 = vmul.f32 %v846, %v827
  %v858 = vmul.f32 %v850, %v828
  %v861 = vlaneseq
  %v862 = vshrl.u32 %v861, 7
  %v863 = vsub.s32 0, %v862
  %v864 = vrot.slane %v829, %v863
  %v865 = vlaneseq
  %v866 = vshrl.u32 %v865, 7
  %v867 = vsub.s32 1, %v866
  %v868 = vrot.slane %v829, %v867
  %v869 = vlaneseq
  %v870 = vshrl.u32 %v869, 7
  %v871 = vsub.s32 0, %v870
  %v872 = vrot.slane %v830, %v871
  %v873 = vlaneseq
  %v874 = vshrl.u32 %v873, 7
  %v875 = vsub.s32 1, %v874
  %v876 = vrot.slane %v830, %v875
  %v881 = vmul.f32 %v864, %v825
  %v882 = vmul.f32 %v868, %v826
  %v883 = vmul.f32 %v872, %v825
  %v884 = vmul.f32 %v876, %v826
  %v885 = vsub.f32 %v855, %v881
  %v886 = vsub.f32 %v856, %v882
  %v887 = vsub.f32 %v857, %v883
  %v888 = vsub.f32 %v858, %v884
  %v889 = vadd.f32 %v775, %v885
  %v890 = vadd.f32 %v776, %v886
  %v891 = vadd.f32 %v777, %v887
  %v892 = vadd.f32 %v778, %v888
  %v895 = vlaneseq
  %v896 = vshrl.u32 %v895, 7
  %v897 = vsub.s32 0, %v896
  %v898 = vrot.slane %v831, %v897
  %v899 = vlaneseq
  %v900 = vshrl.u32 %v899, 7
  %v901 = vsub.s32 1, %v900
  %v902 = vrot.slane %v831, %v901
  %v903 = vlaneseq
  %v904 = vshrl.u32 %v903, 7
  %v905 = vsub.s32 0, %v904
  %v906 = vrot.slane %v832, %v905
  %v907 = vlaneseq
  %v908 = vshrl.u32 %v907, 7
  %v909 = vsub.s32 1, %v908
  %v910 = vrot.slane %v832, %v909
  %v915 = vmul.f32 %v898, %v822
  %v916 = vmul.f32 %v902, %v823
  %v917 = vmul.f32 %v906, %v822
  %v918 = vmul.f32 %v910, %v823
  %v919 = vadd.f32 %v855, %v915
  %v920 = vadd.f32 %v856, %v916
  %v921 = vadd.f32 %v857, %v917
  %v922 = vadd.f32 %v858, %v918
  %v923 = vadd.f32 %v809, %v919
  %v924 = vadd.f32 %v810, %v920
  %v925 = vadd.f32 %v811, %v921
  %v926 = vadd.f32 %v812, %v922
  %927 = vst [vmem:[%s4] sm:$0xff] %v889
  %928 = vst [vmem:[%s4 + $0x8] sm:$0xff] %v890
  %929 = vst [vmem:[%s4 + $0x10] sm:$0xff] %v891
  %930 = vst [vmem:[%s4 + $0x18] sm:$0xff] %v892
  %931 = vst [vmem:[%s5] sm:$0xff] %v923
  %932 = vst [vmem:[%s5 + $0x8] sm:$0xff] %v924
  %933 = vst [vmem:[%s5 + $0x10] sm:$0xff] %v925
  %934 = vst [vmem:[%s5 + $0x18] sm:$0xff] %v926
  // Predicated region
  $region18: #{li_res_conv_ortho_forward.3} parent=0 // pred_check
    _
  $region19: #{li_res_conv_ortho_forward.3} parent=0 // pred_check_branch
    %936 = sbr.rel (0) target = $region21
  $region20: #{li_res_conv_ortho_forward.3} parent=0 // pred_region
    _
  $region21: #{li_res_conv_ortho_forward.3} parent=0 // pred_fallthru
    _
  // Predicated region
  $region22: #{li_res_conv_ortho_forward.3} parent=0 // pred_check
    _
  $region23: #{li_res_conv_ortho_forward.3} parent=0 // pred_check_branch
    %938 = sbr.rel (0) target = $region25
  $region24: #{li_res_conv_ortho_forward.3} parent=0 // pred_region
    _
  $region25: #{li_res_conv_ortho_forward.3} parent=0 // pred_fallthru
    _
  // Predicated region
  $region26: #{li_res_conv_ortho_forward.3} parent=0 // pred_check
    _
  $region27: #{li_res_conv_ortho_forward.3} parent=0 // pred_check_branch
    %940 = sbr.rel (0) target = $region29
  $region28: #{li_res_conv_ortho_forward.3} parent=0 // pred_region
    _
  $region29: #{li_res_conv_ortho_forward.3} parent=0 // pred_fallthru
    _
  // Predicated region
  $region30: #{li_res_conv_ortho_forward.3} parent=0 // pred_check
    _
  $region31: #{li_res_conv_ortho_forward.3} parent=0 // pred_check_branch
    %942 = sbr.rel (0) target = $region33
  $region32: #{li_res_conv_ortho_forward.3} parent=0 // pred_region
    _
  $region33: #{li_res_conv_ortho_forward.3} parent=0 // pred_fallthru
    _

// kernel: reverse.7
$region0: #{reverse.7}
  %s0 = inlined_call_operand.vmem [shape: f32[2,8,18,8], index: 0, kind: input, shape index: {}]
  %s1 = inlined_call_operand.vmem [shape: f32[2,8,18,8], index: 1, kind: output, shape index: {}]
  $region1: #{reverse.7} parent=0
    #allocation0 [shape = 'u8[65536]{0}', space=vmem, size = 0x10000, scoped, tag = 'operand span for operand 0']
    #allocation1 [shape = 'u8[65536]{0}', space=vmem, size = 0x10000, scoped, tag = 'operand span for operand 1']
    // Predicated region
    $region2: #{reverse.7} parent=1 // pred_check
      _
    $region3: #{reverse.7} parent=1 // pred_check_branch
      %3 = sbr.rel (0) target = $region5
    $region4: #{reverse.7} parent=1 // pred_region
      // Predicated region
      $region6: #{reverse.7} parent=4 // pred_check
        _
      $region7: #{reverse.7} parent=4 // pred_check_branch
        %5 = sbr.rel (0) target = $region9
      $region8: #{reverse.7} parent=4 // pred_region
        // Predicated region
        $region21: #{reverse.7} parent=8 // pred_check
          _
        $region22: #{reverse.7} parent=8 // pred_check_branch
          %51 = sbr.rel (0) target = $region24
        $region23: #{reverse.7} parent=8 // pred_region
          loop: start=0, step=1, limit=1
          $region25: #{reverse.7} parent=23 // loop_pre_header
            _
          $region26: #{reverse.7} parent=23 // loop_header
            %s53 = sphi 0, %s57
            %p54 = scmp.ge.s32.totalorder %s53, 1
            %s58 = sphi %s0, %s0
            %s59 = sphi [#allocation0], [#allocation0]
          $region27: #{reverse.7} parent=23 // loop_header_branch
            %56 = sbr.rel (%p54) target = $region31
          $region28: #{reverse.7} parent=23 // loop_body
            %v60 = vld [vmem:[%s58] sm:$0xff]
            %61 = vst [vmem:[%s59] sm:$0xff] %v60
            %v62 = vld [vmem:[%s58 + $0x8] sm:$0xff]
            %63 = vst [vmem:[%s59 + $0x8] sm:$0xff] %v62
            %v64 = vld [vmem:[%s58 + $0x10] sm:$0xff]
            %65 = vst [vmem:[%s59 + $0x10] sm:$0xff] %v64
            %v66 = vld [vmem:[%s58 + $0x18] sm:$0xff]
            %67 = vst [vmem:[%s59 + $0x18] sm:$0xff] %v66
            %v68 = vld [vmem:[%s58 + $0x20] sm:$0xff]
            %69 = vst [vmem:[%s59 + $0x20] sm:$0xff] %v68
            %v70 = vld [vmem:[%s58 + $0x28] sm:$0xff]
            %71 = vst [vmem:[%s59 + $0x28] sm:$0xff] %v70
            %v72 = vld [vmem:[%s58 + $0x30] sm:$0xff]
            %73 = vst [vmem:[%s59 + $0x30] sm:$0xff] %v72
            %v74 = vld [vmem:[%s58 + $0x38] sm:$0xff]
            %75 = vst [vmem:[%s59 + $0x38] sm:$0xff] %v74
            %v76 = vld [vmem:[%s58 + $0x40] sm:$0xff]
            %77 = vst [vmem:[%s59 + $0x40] sm:$0xff] %v76
            %v78 = vld [vmem:[%s58 + $0x48] sm:$0xff]
            %79 = vst [vmem:[%s59 + $0x48] sm:$0xff] %v78
            %v80 = vld [vmem:[%s58 + $0x50] sm:$0xff]
            %81 = vst [vmem:[%s59 + $0x50] sm:$0xff] %v80
            %v82 = vld [vmem:[%s58 + $0x58] sm:$0xff]
            %83 = vst [vmem:[%s59 + $0x58] sm:$0xff] %v82
            %v84 = vld [vmem:[%s58 + $0x60] sm:$0xff]
            %85 = vst [vmem:[%s59 + $0x60] sm:$0xff] %v84
            %v86 = vld [vmem:[%s58 + $0x68] sm:$0xff]
            %87 = vst [vmem:[%s59 + $0x68] sm:$0xff] %v86
            %v88 = vld [vmem:[%s58 + $0x70] sm:$0xff]
            %89 = vst [vmem:[%s59 + $0x70] sm:$0xff] %v88
            %v90 = vld [vmem:[%s58 + $0x78] sm:$0xff]
            %91 = vst [vmem:[%s59 + $0x78] sm:$0xff] %v90
          $region29: #{reverse.7} parent=23 // loop_footer
            %s57 = sadd.s32 1, %s53
          $region30: #{reverse.7} parent=23 // loop_footer_branch
            %52 = sbr.rel target = $region26
          $region31: #{reverse.7} parent=23 // loop_exit
            _
        $region24: #{reverse.7} parent=8 // pred_fallthru
          _
        // Predicated region
        $region32: #{reverse.7} parent=8 // pred_check
          _
        $region33: #{reverse.7} parent=8 // pred_check_branch
          %93 = sbr.rel target = $region35
        $region34: #{reverse.7} parent=8 // pred_region
          _
        $region35: #{reverse.7} parent=8 // pred_fallthru
          _
      $region9: #{reverse.7} parent=4 // pred_fallthru
        _
      // Predicated region
      $region10: #{reverse.7} parent=4 // pred_check
        _
      $region11: #{reverse.7} parent=4 // pred_check_branch
        %7 = sbr.rel target = $region13
      $region12: #{reverse.7} parent=4 // pred_region
        %s9 = ssub.s32 256, 1
        loop: start=0, step=1, limit=1
        $region14: #{reverse.7} parent=12 // loop_pre_header
          _
        $region15: #{reverse.7} parent=12 // loop_header
          %s11 = sphi 0, %s15
          %p12 = scmp.ge.s32.totalorder %s11, 1
          %s16 = sphi %s0, %s0
          %s17 = sphi [#allocation0], [#allocation0]
        $region16: #{reverse.7} parent=12 // loop_header_branch
          %14 = sbr.rel (%p12) target = $region20
        $region17: #{reverse.7} parent=12 // loop_body
          %v18 = vld [vmem:[%s16] sm:%s9]
          %19 = vst [vmem:[%s17] sm:%s9] %v18
          %v20 = vld [vmem:[%s16 + $0x8] sm:%s9]
          %21 = vst [vmem:[%s17 + $0x8] sm:%s9] %v20
          %v22 = vld [vmem:[%s16 + $0x10] sm:%s9]
          %23 = vst [vmem:[%s17 + $0x10] sm:%s9] %v22
          %v24 = vld [vmem:[%s16 + $0x18] sm:%s9]
          %25 = vst [vmem:[%s17 + $0x18] sm:%s9] %v24
          %v26 = vld [vmem:[%s16 + $0x20] sm:%s9]
          %27 = vst [vmem:[%s17 + $0x20] sm:%s9] %v26
          %v28 = vld [vmem:[%s16 + $0x28] sm:%s9]
          %29 = vst [vmem:[%s17 + $0x28] sm:%s9] %v28
          %v30 = vld [vmem:[%s16 + $0x30] sm:%s9]
          %31 = vst [vmem:[%s17 + $0x30] sm:%s9] %v30
          %v32 = vld [vmem:[%s16 + $0x38] sm:%s9]
          %33 = vst [vmem:[%s17 + $0x38] sm:%s9] %v32
          %v34 = vld [vmem:[%s16 + $0x40] sm:%s9]
          %35 = vst [vmem:[%s17 + $0x40] sm:%s9] %v34
          %v36 = vld [vmem:[%s16 + $0x48] sm:%s9]
          %37 = vst [vmem:[%s17 + $0x48] sm:%s9] %v36
          %v38 = vld [vmem:[%s16 + $0x50] sm:%s9]
          %39 = vst [vmem:[%s17 + $0x50] sm:%s9] %v38
          %v40 = vld [vmem:[%s16 + $0x58] sm:%s9]
          %41 = vst [vmem:[%s17 + $0x58] sm:%s9] %v40
          %v42 = vld [vmem:[%s16 + $0x60] sm:%s9]
          %43 = vst [vmem:[%s17 + $0x60] sm:%s9] %v42
          %v44 = vld [vmem:[%s16 + $0x68] sm:%s9]
          %45 = vst [vmem:[%s17 + $0x68] sm:%s9] %v44
          %v46 = vld [vmem:[%s16 + $0x70] sm:%s9]
          %47 = vst [vmem:[%s17 + $0x70] sm:%s9] %v46
          %v48 = vld [vmem:[%s16 + $0x78] sm:%s9]
          %49 = vst [vmem:[%s17 + $0x78] sm:%s9] %v48
        $region18: #{reverse.7} parent=12 // loop_footer
          %s15 = sadd.s32 1, %s11
        $region19: #{reverse.7} parent=12 // loop_footer_branch
          %10 = sbr.rel target = $region15
        $region20: #{reverse.7} parent=12 // loop_exit
          _
      $region13: #{reverse.7} parent=4 // pred_fallthru
        _
    $region5: #{reverse.7} parent=1 // pred_fallthru
      _
    %94 = vnop
    %s95 = scalar_lea.vmem [#allocation0], 7
    %v96 = vld [vmem:[%s95] ss:$-1 sm:$0xff]
    %97 = vst [vmem:[#allocation1] sm:$0xff] %v96
    %s98 = scalar_lea.vmem [#allocation1], 8
    %s99 = scalar_lea.vmem [#allocation0], 8
    %s100 = scalar_lea.vmem %s99, 7 [#allocation0]
    %v101 = vld [vmem:[%s100] ss:$-1 sm:$0xff]
    %102 = vst [vmem:[%s98] sm:$0xff] %v101
    %s103 = scalar_lea.vmem [#allocation1], 16
    %s104 = scalar_lea.vmem [#allocation0], 16
    %s105 = scalar_lea.vmem %s104, 7 [#allocation0]
    %v106 = vld [vmem:[%s105] ss:$-1 sm:$0xff]
    %107 = vst [vmem:[%s103] sm:$0xff] %v106
    %s108 = scalar_lea.vmem [#allocation1], 24
    %s109 = scalar_lea.vmem [#allocation0], 24
    %s110 = scalar_lea.vmem %s109, 7 [#allocation0]
    %v111 = vld [vmem:[%s110] ss:$-1 sm:$0xff]
    %112 = vst [vmem:[%s108] sm:$0xff] %v111
    %s113 = scalar_lea.vmem [#allocation1], 32
    %s114 = scalar_lea.vmem [#allocation0], 32
    %s115 = scalar_lea.vmem %s114, 7 [#allocation0]
    %v116 = vld [vmem:[%s115] ss:$-1 sm:$0xff]
    %117 = vst [vmem:[%s113] sm:$0xff] %v116
    %s118 = scalar_lea.vmem [#allocation1], 40
    %s119 = scalar_lea.vmem [#allocation0], 40
    %s120 = scalar_lea.vmem %s119, 7 [#allocation0]
    %v121 = vld [vmem:[%s120] ss:$-1 sm:$0xff]
    %122 = vst [vmem:[%s118] sm:$0xff] %v121
    %s123 = scalar_lea.vmem [#allocation1], 48
    %s124 = scalar_lea.vmem [#allocation0], 48
    %s125 = scalar_lea.vmem %s124, 7 [#allocation0]
    %v126 = vld [vmem:[%s125] ss:$-1 sm:$0xff]
    %127 = vst [vmem:[%s123] sm:$0xff] %v126
    %s128 = scalar_lea.vmem [#allocation1], 56
    %s129 = scalar_lea.vmem [#allocation0], 56
    %s130 = scalar_lea.vmem %s129, 7 [#allocation0]
    %v131 = vld [vmem:[%s130] ss:$-1 sm:$0xff]
    %132 = vst [vmem:[%s128] sm:$0xff] %v131
    %s133 = scalar_lea.vmem [#allocation1], 64
    %s134 = scalar_lea.vmem [#allocation0], 64
    %s135 = scalar_lea.vmem %s134, 7 [#allocation0]
    %v136 = vld [vmem:[%s135] ss:$-1 sm:$0xff]
    %137 = vst [vmem:[%s133] sm:$0xff] %v136
    %s138 = scalar_lea.vmem [#allocation1], 72
    %s139 = scalar_lea.vmem [#allocation0], 72
    %s140 = scalar_lea.vmem %s139, 7 [#allocation0]
    %v141 = vld [vmem:[%s140] ss:$-1 sm:$0xff]
    %142 = vst [vmem:[%s138] sm:$0xff] %v141
    %s143 = scalar_lea.vmem [#allocation1], 80
    %s144 = scalar_lea.vmem [#allocation0], 80
    %s145 = scalar_lea.vmem %s144, 7 [#allocation0]
    %v146 = vld [vmem:[%s145] ss:$-1 sm:$0xff]
    %147 = vst [vmem:[%s143] sm:$0xff] %v146
    %s148 = scalar_lea.vmem [#allocation1], 88
    %s149 = scalar_lea.vmem [#allocation0], 88
    %s150 = scalar_lea.vmem %s149, 7 [#allocation0]
    %v151 = vld [vmem:[%s150] ss:$-1 sm:$0xff]
    %152 = vst [vmem:[%s148] sm:$0xff] %v151
    %s153 = scalar_lea.vmem [#allocation1], 96
    %s154 = scalar_lea.vmem [#allocation0], 96
    %s155 = scalar_lea.vmem %s154, 7 [#allocation0]
    %v156 = vld [vmem:[%s155] ss:$-1 sm:$0xff]
    %157 = vst [vmem:[%s153] sm:$0xff] %v156
    %s158 = scalar_lea.vmem [#allocation1], 104
    %s159 = scalar_lea.vmem [#allocation0], 104
    %s160 = scalar_lea.vmem %s159, 7 [#allocation0]
    %v161 = vld [vmem:[%s160] ss:$-1 sm:$0xff]
    %162 = vst [vmem:[%s158] sm:$0xff] %v161
    %s163 = scalar_lea.vmem [#allocation1], 112
    %s164 = scalar_lea.vmem [#allocation0], 112
    %s165 = scalar_lea.vmem %s164, 7 [#allocation0]
    %v166 = vld [vmem:[%s165] ss:$-1 sm:$0xff]
    %167 = vst [vmem:[%s163] sm:$0xff] %v166
    %s168 = scalar_lea.vmem [#allocation1], 120
    %s169 = scalar_lea.vmem [#allocation0], 120
    %s170 = scalar_lea.vmem %s169, 7 [#allocation0]
    %v171 = vld [vmem:[%s170] ss:$-1 sm:$0xff]
    %172 = vst [vmem:[%s168] sm:$0xff] %v171
    // Predicated region
    $region36: #{reverse.7} parent=1 // pred_check
      _
    $region37: #{reverse.7} parent=1 // pred_check_branch
      %174 = sbr.rel (0) target = $region39
    $region38: #{reverse.7} parent=1 // pred_region
      // Predicated region
      $region40: #{reverse.7} parent=38 // pred_check
        _
      $region41: #{reverse.7} parent=38 // pred_check_branch
        %176 = sbr.rel (0) target = $region43
      $region42: #{reverse.7} parent=38 // pred_region
        // Predicated region
        $region55: #{reverse.7} parent=42 // pred_check
          _
        $region56: #{reverse.7} parent=42 // pred_check_branch
          %222 = sbr.rel (0) target = $region58
        $region57: #{reverse.7} parent=42 // pred_region
          loop: start=0, step=1, limit=1
          $region59: #{reverse.7} parent=57 // loop_pre_header
            _
          $region60: #{reverse.7} parent=57 // loop_header
            %s224 = sphi 0, %s228
            %p225 = scmp.ge.s32.totalorder %s224, 1
            %s229 = sphi [#allocation1], [#allocation1]
            %s230 = sphi %s1, %s1
          $region61: #{reverse.7} parent=57 // loop_header_branch
            %227 = sbr.rel (%p225) target = $region65
          $region62: #{reverse.7} parent=57 // loop_body
            %v231 = vld [vmem:[%s229] sm:$0xff]
            %232 = vst [vmem:[%s230] sm:$0xff] %v231
            %v233 = vld [vmem:[%s229 + $0x8] sm:$0xff]
            %234 = vst [vmem:[%s230 + $0x8] sm:$0xff] %v233
            %v235 = vld [vmem:[%s229 + $0x10] sm:$0xff]
            %236 = vst [vmem:[%s230 + $0x10] sm:$0xff] %v235
            %v237 = vld [vmem:[%s229 + $0x18] sm:$0xff]
            %238 = vst [vmem:[%s230 + $0x18] sm:$0xff] %v237
            %v239 = vld [vmem:[%s229 + $0x20] sm:$0xff]
            %240 = vst [vmem:[%s230 + $0x20] sm:$0xff] %v239
            %v241 = vld [vmem:[%s229 + $0x28] sm:$0xff]
            %242 = vst [vmem:[%s230 + $0x28] sm:$0xff] %v241
            %v243 = vld [vmem:[%s229 + $0x30] sm:$0xff]
            %244 = vst [vmem:[%s230 + $0x30] sm:$0xff] %v243
            %v245 = vld [vmem:[%s229 + $0x38] sm:$0xff]
            %246 = vst [vmem:[%s230 + $0x38] sm:$0xff] %v245
            %v247 = vld [vmem:[%s229 + $0x40] sm:$0xff]
            %248 = vst [vmem:[%s230 + $0x40] sm:$0xff] %v247
            %v249 = vld [vmem:[%s229 + $0x48] sm:$0xff]
            %250 = vst [vmem:[%s230 + $0x48] sm:$0xff] %v249
            %v251 = vld [vmem:[%s229 + $0x50] sm:$0xff]
            %252 = vst [vmem:[%s230 + $0x50] sm:$0xff] %v251
            %v253 = vld [vmem:[%s229 + $0x58] sm:$0xff]
            %254 = vst [vmem:[%s230 + $0x58] sm:$0xff] %v253
            %v255 = vld [vmem:[%s229 + $0x60] sm:$0xff]
            %256 = vst [vmem:[%s230 + $0x60] sm:$0xff] %v255
            %v257 = vld [vmem:[%s229 + $0x68] sm:$0xff]
            %258 = vst [vmem:[%s230 + $0x68] sm:$0xff] %v257
            %v259 = vld [vmem:[%s229 + $0x70] sm:$0xff]
            %260 = vst [vmem:[%s230 + $0x70] sm:$0xff] %v259
            %v261 = vld [vmem:[%s229 + $0x78] sm:$0xff]
            %262 = vst [vmem:[%s230 + $0x78] sm:$0xff] %v261
          $region63: #{reverse.7} parent=57 // loop_footer
            %s228 = sadd.s32 1, %s224
          $region64: #{reverse.7} parent=57 // loop_footer_branch
            %223 = sbr.rel target = $region60
          $region65: #{reverse.7} parent=57 // loop_exit
            _
        $region58: #{reverse.7} parent=42 // pred_fallthru
          _
        // Predicated region
        $region66: #{reverse.7} parent=42 // pred_check
          _
        $region67: #{reverse.7} parent=42 // pred_check_branch
          %264 = sbr.rel target = $region69
        $region68: #{reverse.7} parent=42 // pred_region
          _
        $region69: #{reverse.7} parent=42 // pred_fallthru
          _
      $region43: #{reverse.7} parent=38 // pred_fallthru
        _
      // Predicated region
      $region44: #{reverse.7} parent=38 // pred_check
        _
      $region45: #{reverse.7} parent=38 // pred_check_branch
        %178 = sbr.rel target = $region47
      $region46: #{reverse.7} parent=38 // pred_region
        %s180 = ssub.s32 256, 1
        loop: start=0, step=1, limit=1
        $region48: #{reverse.7} parent=46 // loop_pre_header
          _
        $region49: #{reverse.7} parent=46 // loop_header
          %s182 = sphi 0, %s186
          %p183 = scmp.ge.s32.totalorder %s182, 1
          %s187 = sphi [#allocation1], [#allocation1]
          %s188 = sphi %s1, %s1
        $region50: #{reverse.7} parent=46 // loop_header_branch
          %185 = sbr.rel (%p183) target = $region54
        $region51: #{reverse.7} parent=46 // loop_body
          %v189 = vld [vmem:[%s187] sm:%s180]
          %190 = vst [vmem:[%s188] sm:%s180] %v189
          %v191 = vld [vmem:[%s187 + $0x8] sm:%s180]
          %192 = vst [vmem:[%s188 + $0x8] sm:%s180] %v191
          %v193 = vld [vmem:[%s187 + $0x10] sm:%s180]
          %194 = vst [vmem:[%s188 + $0x10] sm:%s180] %v193
          %v195 = vld [vmem:[%s187 + $0x18] sm:%s180]
          %196 = vst [vmem:[%s188 + $0x18] sm:%s180] %v195
          %v197 = vld [vmem:[%s187 + $0x20] sm:%s180]
          %198 = vst [vmem:[%s188 + $0x20] sm:%s180] %v197
          %v199 = vld [vmem:[%s187 + $0x28] sm:%s180]
          %200 = vst [vmem:[%s188 + $0x28] sm:%s180] %v199
          %v201 = vld [vmem:[%s187 + $0x30] sm:%s180]
          %202 = vst [vmem:[%s188 + $0x30] sm:%s180] %v201
          %v203 = vld [vmem:[%s187 + $0x38] sm:%s180]
          %204 = vst [vmem:[%s188 + $0x38] sm:%s180] %v203
          %v205 = vld [vmem:[%s187 + $0x40] sm:%s180]
          %206 = vst [vmem:[%s188 + $0x40] sm:%s180] %v205
          %v207 = vld [vmem:[%s187 + $0x48] sm:%s180]
          %208 = vst [vmem:[%s188 + $0x48] sm:%s180] %v207
          %v209 = vld [vmem:[%s187 + $0x50] sm:%s180]
          %210 = vst [vmem:[%s188 + $0x50] sm:%s180] %v209
          %v211 = vld [vmem:[%s187 + $0x58] sm:%s180]
          %212 = vst [vmem:[%s188 + $0x58] sm:%s180] %v211
          %v213 = vld [vmem:[%s187 + $0x60] sm:%s180]
          %214 = vst [vmem:[%s188 + $0x60] sm:%s180] %v213
          %v215 = vld [vmem:[%s187 + $0x68] sm:%s180]
          %216 = vst [vmem:[%s188 + $0x68] sm:%s180] %v215
          %v217 = vld [vmem:[%s187 + $0x70] sm:%s180]
          %218 = vst [vmem:[%s188 + $0x70] sm:%s180] %v217
          %v219 = vld [vmem:[%s187 + $0x78] sm:%s180]
          %220 = vst [vmem:[%s188 + $0x78] sm:%s180] %v219
        $region52: #{reverse.7} parent=46 // loop_footer
          %s186 = sadd.s32 1, %s182
        $region53: #{reverse.7} parent=46 // loop_footer_branch
          %181 = sbr.rel target = $region49
        $region54: #{reverse.7} parent=46 // loop_exit
          _
      $region47: #{reverse.7} parent=38 // pred_fallthru
        _
    $region39: #{reverse.7} parent=1 // pred_fallthru
      _
    %265 = vnop

// kernel: sub.11
$region0: #{sub.11}
  #allocation0 [shape = 's32[1]{0}', space=sflag, size = 0x4, scoped, tag = 'scoped memory for sub.11']
  %s0 = inlined_call_operand.vmem [shape: f32[3,8], index: 0, kind: input, shape index: {}]
  %s1 = inlined_call_operand.vmem [shape: f32[3,8], index: 1, kind: input, shape index: {}]
  %s2 = inlined_call_operand.vmem [shape: f32[3,8], index: 2, kind: output, shape index: {}]
  %v3 = vld [vmem:[%s0] sm:$0x7]
  %v4 = vld [vmem:[%s1] sm:$0x7]
  %5 = xla_tuple %v3, %v4
  %6 = xla_tuple %5
  %v7 = vsub.f32 %v3, %v4
  %8 = xla_tuple %v7
  %9 = vst [vmem:[%s2] sm:$0xf] %v7

</llo_original>
